<compile_context>
chip_gen: v7x
topology: tpu7x:2x2x1
jax: 0.10.0
libtpu: 0.0.40
codegen_flags: <defaults>
</compile_context>

<pallas_src>
import jax
import jax.numpy as jnp
from jax import lax
from jax.experimental import pallas as pl
from jax.experimental.pallas import tpu as pltpu

# --- small, shape-consistent config (LLaMA-2 "top" = last N decoder blocks + norm + head)
BATCH = 2
SEQ = 8
HIDDEN = 32
HEADS = 4
HEAD_DIM = HIDDEN // HEADS
INTER = 64            # MLP intermediate size
VOCAB = 128
NUM_LAYERS = 2        # = num_hidden_layers - split_point_2
EPS = 1e-6
ROPE_THETA = 10000.0
NEG_BIG = -1e30

BS_TOTAL = BATCH * SEQ

# per-layer packed weight slab layout (columns; 128-aligned where it matters)
COL_QKV = 0                         # width 5*HIDDEN = 160   [Wq | Wq@P | Wk | Wk@P | Wv]
COL_GU = 256                        # width 2*INTER  = 128   [Wgate | Wup]   (vreg aligned)
COL_O = 384                         # width HIDDEN   = 32    Wo
COL_D = 416                         # width HIDDEN   = 32    Wdown (uses all INTER rows)
SLAB_COLS = 448
SLAB_ROWS = max(HIDDEN, INTER)      # 64

# rows inside the packed f32 "tables" array
ROW_COS = 0
ROW_SIN = BS_TOTAL
ROW_HMASK = 2 * BS_TOTAL
ROW_LN = 2 * BS_TOTAL + HEADS       # then ln1_0, ln2_0, ln1_1, ln2_1, ..., ln_f
N_TABLE_ROWS = ROW_LN + 2 * NUM_LAYERS + 1


def _rmsnorm(x, w):
    # LlamaRMSNorm: x * rsqrt(mean(x^2, -1) + eps) * weight   (f32 math)
    var = jnp.mean(x * x, axis=-1, keepdims=True)
    return x * lax.rsqrt(var + EPS) * w


def _llama2_top_kernel(x_ref, tab_ref, bias_ref, w_ref, head_ref, out_ref):
    f32, bf16 = jnp.float32, jnp.bfloat16
    BS = x_ref.shape[0]
    D = HIDDEN
    HB = HEADS * BS

    x = x_ref[...]                                   # (BS, D) f32, resident across layers
    cos = tab_ref[ROW_COS:ROW_COS + BS, :]           # (BS, D) full-width RoPE tables
    sin = tab_ref[ROW_SIN:ROW_SIN + BS, :]
    hmask = tab_ref[ROW_HMASK:ROW_HMASK + HEADS, :][:, None, :]   # (H, 1, D) head lane masks
    bias = bias_ref[...]                             # (HB, HB): 0 / -1e30
    scale = 1.0 / (HEAD_DIM ** 0.5)

    for l in range(NUM_LAYERS):                      # static unroll; weights already in VMEM
        ln1 = tab_ref[ROW_LN + 2 * l:ROW_LN + 2 * l + 1, :]
        ln2 = tab_ref[ROW_LN + 2 * l + 1:ROW_LN + 2 * l + 2, :]
        wqkv = w_ref[l, 0:D, COL_QKV:COL_QKV + 5 * D]
        wgu = w_ref[l, 0:D, COL_GU:COL_GU + 2 * INTER]
        wo = w_ref[l, 0:D, COL_O:COL_O + D]
        wd = w_ref[l, 0:INTER, COL_D:COL_D + D]

        # ---- self-attention block ----
        h = _rmsnorm(x, ln1)
        # fused [Wq | Wq@P | Wk | Wk@P | Wv] ; P = exact signed rotate_half permutation
        qkv = jnp.dot(h.astype(bf16), wqkv, preferred_element_type=f32)   # (BS, 5D)
        q, qrot = qkv[:, 0:D], qkv[:, D:2 * D]
        k, krot = qkv[:, 2 * D:3 * D], qkv[:, 3 * D:4 * D]
        v = qkv[:, 4 * D:5 * D]
        qr = q * cos + qrot * sin                    # RoPE: pure VPU FMAs
        kr = k * cos + krot * sin

        # block-diagonal attention over (H*BS) lane-dense rows:
        #   Q head-stacked (unmasked), K/V head-lane-masked; off-diagonal head blocks and
        #   non-causal / cross-batch entries are killed by the precomputed additive bias.
        qs = jnp.broadcast_to(qr, (HEADS, BS, D)).reshape(HB, D)
        ks = (kr[None, :, :] * hmask).reshape(HB, D)
        vs = (v[None, :, :] * hmask).reshape(HB, D)

        s = lax.dot_general(qs.astype(bf16), ks.astype(bf16),
                            dimension_numbers=(((1,), (1,)), ((), ())),
                            preferred_element_type=f32) * scale + bias    # (HB, HB)
        s = s - jnp.max(s, axis=-1, keepdims=True)                        # f32 softmax
        p = jnp.exp(s)
        p = p * pl.reciprocal(jnp.sum(p, axis=-1, keepdims=True), approx=True)
        o = jnp.dot(p.astype(bf16), vs.astype(bf16),
                    preferred_element_type=f32)                           # (HB, D)
        attn = jnp.sum(o.reshape(HEADS, BS, D), axis=0)   # heads on disjoint lanes -> concat
        x = x + jnp.dot(attn.astype(bf16), wo, preferred_element_type=f32)

        # ---- MLP block (SwiGLU), gate/up fused into one lane-dense (D, 128) matmul ----
        h = _rmsnorm(x, ln2)
        gu = jnp.dot(h.astype(bf16), wgu, preferred_element_type=f32)     # (BS, 2*INTER)
        g, u = gu[:, :INTER], gu[:, INTER:]
        sig = 0.5 * (1.0 + jnp.tanh(0.5 * g))        # sigmoid via single tanh EUP push
        x = x + jnp.dot((g * sig * u).astype(bf16), wd, preferred_element_type=f32)

    # ---- final RMSNorm + lm_head (lane-dense V=128 store) ----
    lnf = tab_ref[ROW_LN + 2 * NUM_LAYERS:ROW_LN + 2 * NUM_LAYERS + 1, :]
    h = _rmsnorm(x, lnf)
    out_ref[...] = jnp.dot(h.astype(bf16), head_ref[...], preferred_element_type=f32)


def rope_tables(seq_len):
    # cache_position = arange(seq); HF LLaMA rotary tables of shape (S, HEAD_DIM)
    inv_freq = 1.0 / (ROPE_THETA ** (jnp.arange(0, HEAD_DIM, 2, dtype=jnp.float32) / HEAD_DIM))
    pos = jnp.arange(seq_len, dtype=jnp.float32)
    freqs = pos[:, None] * inv_freq[None, :]
    emb = jnp.concatenate([freqs, freqs], axis=-1)
    return jnp.cos(emb), jnp.sin(emb)


def _rotate_half_matrix():
    # P (D, D), block-diagonal per head, such that (t @ P) == HF rotate_half(t) per head.
    half = HEAD_DIM // 2
    ii = jnp.arange(HIDDEN)[:, None]
    jj = jnp.arange(HIDDEN)[None, :]
    same_head = (ii // HEAD_DIM) == (jj // HEAD_DIM)
    jh = jj % HEAD_DIM
    neg = same_head & (ii == jj + half) & (jh < half)
    pos = same_head & (ii == jj - half) & (jh >= half)
    return jnp.where(neg, -1.0, 0.0) + jnp.where(pos, 1.0, 0.0)


def _attn_bias():
    # (H*BS, H*BS) additive mask: 0 iff same head block, same batch, and key pos <= query pos.
    r = jnp.arange(HEADS * BS_TOTAL)
    head = r // BS_TOTAL
    tok = r % BS_TOTAL
    bat = tok // SEQ
    pos = tok % SEQ
    ok = ((head[:, None] == head[None, :]) &
          (bat[:, None] == bat[None, :]) &
          (pos[None, :] <= pos[:, None]))
    return jnp.where(ok, 0.0, NEG_BIG).astype(jnp.float32)


def init_params(key):
    # deterministic synthetic weights (RMSNorm weights = 1, projections ~ N(0, 0.02)),
    # pre-packed into the few arrays the kernel actually DMAs.
    def mat(k, shape):
        return 0.02 * jax.random.normal(k, shape, dtype=jnp.float32)

    P = _rotate_half_matrix()
    slabs, ln_rows = [], []
    for i in range(NUM_LAYERS):
        ks = jax.random.split(jax.random.fold_in(key, i), 7)
        wq = mat(ks[0], (HIDDEN, HIDDEN))
        wk = mat(ks[1], (HIDDEN, HIDDEN))
        wv = mat(ks[2], (HIDDEN, HIDDEN))
        wqkv = jnp.concatenate([wq, wq @ P, wk, wk @ P, wv], axis=1)       # (D, 5D)
        wo = mat(ks[3], (HIDDEN, HIDDEN))
        wgu = jnp.concatenate([mat(ks[4], (HIDDEN, INTER)),
                               mat(ks[5], (HIDDEN, INTER))], axis=1)       # (D, 2*INTER)
        wd = mat(ks[6], (INTER, HIDDEN))                                   # (INTER, D)

        slab = jnp.zeros((SLAB_ROWS, SLAB_COLS), jnp.float32)
        slab = slab.at[0:HIDDEN, COL_QKV:COL_QKV + 5 * HIDDEN].set(wqkv)
        slab = slab.at[0:HIDDEN, COL_GU:COL_GU + 2 * INTER].set(wgu)
        slab = slab.at[0:HIDDEN, COL_O:COL_O + HIDDEN].set(wo)
        slab = slab.at[0:INTER, COL_D:COL_D + HIDDEN].set(wd)
        slabs.append(slab)

        ln_rows += [jnp.ones((1, HIDDEN), jnp.float32),    # input_layernorm
                    jnp.ones((1, HIDDEN), jnp.float32)]    # post_attention_layernorm
    ln_rows.append(jnp.ones((1, HIDDEN), jnp.float32))     # final model.norm

    kh = jax.random.fold_in(key, 1000)
    whead = (0.02 * jax.random.normal(kh, (HIDDEN, VOCAB), jnp.float32)).astype(jnp.bfloat16)

    cos, sin = rope_tables(SEQ)                                            # (S, hd)
    cos_full = jnp.tile(jnp.tile(cos, (1, HEADS)), (BATCH, 1))             # (BS, D)
    sin_full = jnp.tile(jnp.tile(sin, (1, HEADS)), (BATCH, 1))
    hmask = ((jnp.arange(HIDDEN)[None, :] // HEAD_DIM) ==
             jnp.arange(HEADS)[:, None]).astype(jnp.float32)               # (H, D)

    tables = jnp.concatenate([cos_full, sin_full, hmask] + ln_rows, axis=0)
    assert tables.shape == (N_TABLE_ROWS, HIDDEN)

    return dict(
        tables=tables,                                   # (2BS+H+2L+1, D) f32
        bias=_attn_bias(),                               # (H*BS, H*BS)    f32
        wslab=jnp.stack(slabs).astype(jnp.bfloat16),     # (L, 64, 448)    bf16
        whead=whead,                                     # (D, V)          bf16
    )


@jax.jit
def llama2_top_mocker_forward(x, packed):
    # mirrors LLAMA2TopMocker.forward: last NUM_LAYERS decoder blocks (causal attention,
    # RoPE at positions arange(seq)), then final RMSNorm, then lm_head -- all in one kernel.
    B, S, D = x.shape
    BS = B * S
    vmem = pl.BlockSpec(memory_space=pltpu.MemorySpace.VMEM)
    logits = pl.pallas_call(
        _llama2_top_kernel,
        out_shape=jax.ShapeDtypeStruct((BS, VOCAB), jnp.float32),
        in_specs=[vmem] * 5,
        out_specs=vmem,
    )(x.reshape(BS, D), packed["tables"], packed["bias"],
      packed["wslab"], packed["whead"])
    return logits.reshape(B, S, VOCAB)


if __name__ == "__main__":
    key = jax.random.PRNGKey(0)
    kx, kp = jax.random.split(key)
    x = jax.random.normal(kx, (BATCH, SEQ, HIDDEN), dtype=jnp.float32)
    packed = init_params(kp)                  # constants / weights packed once, outside jit
    logits = llama2_top_mocker_forward(x, packed)
    jax.block_until_ready(logits)
    assert logits.shape == (BATCH, SEQ, VOCAB)
    assert bool(jnp.all(jnp.isfinite(logits)))
    print("KERNEL_OK")
</pallas_src>

<mosaic_0001>
module attributes {stable_mosaic.version = 11 : i64} {
  func.func @_llama2_top_kernel(%arg0: memref<16x32xf32, #tpu.memory_space<vmem>>, %arg1: memref<41x32xf32, #tpu.memory_space<vmem>>, %arg2: memref<64x64xf32, #tpu.memory_space<vmem>>, %arg3: memref<2x64x448xbf16, #tpu.memory_space<vmem>>, %arg4: memref<32x128xbf16, #tpu.memory_space<vmem>>, %arg5: memref<16x128xf32, #tpu.memory_space<vmem>>) attributes {dimension_semantics = [], scalar_prefetch = 0 : i64, scratch_operands = 0 : i64, tpu.core_type = #tpu.core_type<tc>} {
    %c0 = arith.constant 0 : index
    %c0_0 = arith.constant 0 : index
    %0 = vector.load %arg0[%c0, %c0_0] : memref<16x32xf32, #tpu.memory_space<vmem>>, vector<16x32xf32>
    %c0_1 = arith.constant 0 : index
    %c0_2 = arith.constant 0 : index
    %1 = vector.load %arg1[%c0_1, %c0_2] : memref<41x32xf32, #tpu.memory_space<vmem>>, vector<16x32xf32>
    %c16 = arith.constant 16 : index
    %c0_3 = arith.constant 0 : index
    %2 = vector.load %arg1[%c16, %c0_3] : memref<41x32xf32, #tpu.memory_space<vmem>>, vector<16x32xf32>
    %c32 = arith.constant 32 : index
    %c0_4 = arith.constant 0 : index
    %3 = vector.load %arg1[%c32, %c0_4] : memref<41x32xf32, #tpu.memory_space<vmem>>, vector<4x32xf32>
    %4 = vector.shape_cast %3 : vector<4x32xf32> to vector<4x1x32xf32>
    %c0_5 = arith.constant 0 : index
    %c0_6 = arith.constant 0 : index
    %5 = vector.load %arg2[%c0_5, %c0_6] : memref<64x64xf32, #tpu.memory_space<vmem>>, vector<64x64xf32>
    %c36 = arith.constant 36 : index
    %c0_7 = arith.constant 0 : index
    %6 = vector.load %arg1[%c36, %c0_7] : memref<41x32xf32, #tpu.memory_space<vmem>>, vector<1x32xf32>
    %c37 = arith.constant 37 : index
    %c0_8 = arith.constant 0 : index
    %7 = vector.load %arg1[%c37, %c0_8] : memref<41x32xf32, #tpu.memory_space<vmem>>, vector<1x32xf32>
    %c0_9 = arith.constant 0 : index
    %c0_10 = arith.constant 0 : index
    %c0_11 = arith.constant 0 : index
    %8 = vector.load %arg3[%c0_9, %c0_10, %c0_11] : memref<2x64x448xbf16, #tpu.memory_space<vmem>>, vector<1x32x160xbf16>
    %9 = vector.shape_cast %8 : vector<1x32x160xbf16> to vector<32x160xbf16>
    %c0_12 = arith.constant 0 : index
    %c0_13 = arith.constant 0 : index
    %c256 = arith.constant 256 : index
    %10 = vector.load %arg3[%c0_12, %c0_13, %c256] : memref<2x64x448xbf16, #tpu.memory_space<vmem>>, vector<1x32x128xbf16>
    %11 = vector.shape_cast %10 : vector<1x32x128xbf16> to vector<32x128xbf16>
    %c0_14 = arith.constant 0 : index
    %c0_15 = arith.constant 0 : index
    %c384 = arith.constant 384 : index
    %12 = vector.load %arg3[%c0_14, %c0_15, %c384] : memref<2x64x448xbf16, #tpu.memory_space<vmem>>, vector<1x32x32xbf16>
    %13 = vector.shape_cast %12 : vector<1x32x32xbf16> to vector<32x32xbf16>
    %c0_16 = arith.constant 0 : index
    %c0_17 = arith.constant 0 : index
    %c416 = arith.constant 416 : index
    %14 = vector.load %arg3[%c0_16, %c0_17, %c416] : memref<2x64x448xbf16, #tpu.memory_space<vmem>>, vector<1x64x32xbf16>
    %15 = vector.shape_cast %14 : vector<1x64x32xbf16> to vector<64x32xbf16>
    %16 = arith.mulf %0, %0 : vector<16x32xf32>
    %cst = arith.constant dense<0.000000e+00> : vector<16xf32>
    %17 = vector.multi_reduction <add>, %16, %cst [1] : vector<16x32xf32> to vector<16xf32>
    %18 = vector.shape_cast %17 : vector<16xf32> to vector<16x1xf32>
    %cst_18 = arith.constant 3.200000e+01 : f32
    %19 = vector.broadcast %cst_18 : f32 to vector<16x1xf32>
    %20 = arith.divf %18, %19 : vector<16x1xf32>
    %cst_19 = arith.constant 9.99999997E-7 : f32
    %21 = vector.broadcast %cst_19 : f32 to vector<16x1xf32>
    %22 = arith.addf %20, %21 : vector<16x1xf32>
    %23 = math.rsqrt %22 : vector<16x1xf32>
    %24 = vector.broadcast %23 : vector<16x1xf32> to vector<16x32xf32>
    %25 = arith.mulf %0, %24 : vector<16x32xf32>
    %26 = vector.broadcast %6 : vector<1x32xf32> to vector<16x32xf32>
    %27 = arith.mulf %25, %26 : vector<16x32xf32>
    %28 = arith.truncf %27 : vector<16x32xf32> to vector<16x32xbf16>
    %cst_20 = arith.constant dense<0.000000e+00> : vector<16x160xf32>
    %29 = tpu.matmul %28, %9, %cst_20 {dimension_numbers = #tpu.dot_dimension_numbers<[1], [0], [0], [1], [0, 0, 1, 1], [], []>} : vector<16x32xbf16>, vector<32x160xbf16>, vector<16x160xf32> -> vector<16x160xf32>
    %30 = vector.extract_strided_slice %29 {offsets = [0, 0], sizes = [16, 32], strides = [1, 1]} : vector<16x160xf32> to vector<16x32xf32>
    %31 = vector.extract_strided_slice %29 {offsets = [0, 32], sizes = [16, 32], strides = [1, 1]} : vector<16x160xf32> to vector<16x32xf32>
    %32 = vector.extract_strided_slice %29 {offsets = [0, 64], sizes = [16, 32], strides = [1, 1]} : vector<16x160xf32> to vector<16x32xf32>
    %33 = vector.extract_strided_slice %29 {offsets = [0, 96], sizes = [16, 32], strides = [1, 1]} : vector<16x160xf32> to vector<16x32xf32>
    %34 = vector.extract_strided_slice %29 {offsets = [0, 128], sizes = [16, 32], strides = [1, 1]} : vector<16x160xf32> to vector<16x32xf32>
    %35 = arith.mulf %30, %1 : vector<16x32xf32>
    %36 = arith.mulf %31, %2 : vector<16x32xf32>
    %37 = arith.addf %35, %36 : vector<16x32xf32>
    %38 = arith.mulf %32, %1 : vector<16x32xf32>
    %39 = arith.mulf %33, %2 : vector<16x32xf32>
    %40 = arith.addf %38, %39 : vector<16x32xf32>
    %41 = vector.shape_cast %37 : vector<16x32xf32> to vector<1x16x32xf32>
    %42 = vector.broadcast %41 : vector<1x16x32xf32> to vector<4x16x32xf32>
    %43 = vector.shape_cast %42 : vector<4x16x32xf32> to vector<64x32xf32>
    %44 = vector.shape_cast %40 : vector<16x32xf32> to vector<1x16x32xf32>
    %45 = vector.broadcast %44 : vector<1x16x32xf32> to vector<4x16x32xf32>
    %46 = vector.broadcast %4 : vector<4x1x32xf32> to vector<4x16x32xf32>
    %47 = arith.mulf %45, %46 : vector<4x16x32xf32>
    %48 = vector.shape_cast %47 : vector<4x16x32xf32> to vector<64x32xf32>
    %49 = vector.shape_cast %34 : vector<16x32xf32> to vector<1x16x32xf32>
    %50 = vector.broadcast %49 : vector<1x16x32xf32> to vector<4x16x32xf32>
    %51 = vector.broadcast %4 : vector<4x1x32xf32> to vector<4x16x32xf32>
    %52 = arith.mulf %50, %51 : vector<4x16x32xf32>
    %53 = vector.shape_cast %52 : vector<4x16x32xf32> to vector<64x32xf32>
    %54 = arith.truncf %43 : vector<64x32xf32> to vector<64x32xbf16>
    %55 = arith.truncf %48 : vector<64x32xf32> to vector<64x32xbf16>
    %cst_21 = arith.constant dense<0.000000e+00> : vector<64x64xf32>
    %56 = tpu.matmul %54, %55, %cst_21 {dimension_numbers = #tpu.dot_dimension_numbers<[1], [1], [0], [0], [0, 0, 1, 0], [], []>} : vector<64x32xbf16>, vector<64x32xbf16>, vector<64x64xf32> -> vector<64x64xf32>
    %cst_22 = arith.constant 0.353553385 : f32
    %57 = vector.broadcast %cst_22 : f32 to vector<64x64xf32>
    %58 = arith.mulf %56, %57 : vector<64x64xf32>
    %59 = arith.addf %58, %5 : vector<64x64xf32>
    %cst_23 = arith.constant dense<0xFF800000> : vector<64xf32>
    %60 = vector.multi_reduction <maximumf>, %59, %cst_23 [1] : vector<64x64xf32> to vector<64xf32>
    %61 = vector.shape_cast %60 : vector<64xf32> to vector<64x1xf32>
    %62 = vector.broadcast %61 : vector<64x1xf32> to vector<64x64xf32>
    %63 = arith.subf %59, %62 : vector<64x64xf32>
    %64 = math.exp %63 : vector<64x64xf32>
    %cst_24 = arith.constant dense<0.000000e+00> : vector<64xf32>
    %65 = vector.multi_reduction <add>, %64, %cst_24 [1] : vector<64x64xf32> to vector<64xf32>
    %66 = vector.shape_cast %65 : vector<64xf32> to vector<64x1xf32>
    %67 = tpu.reciprocal %66 {approx = true} : vector<64x1xf32> -> vector<64x1xf32>
    %68 = vector.broadcast %67 : vector<64x1xf32> to vector<64x64xf32>
    %69 = arith.mulf %64, %68 : vector<64x64xf32>
    %70 = arith.truncf %69 : vector<64x64xf32> to vector<64x64xbf16>
    %71 = arith.truncf %53 : vector<64x32xf32> to vector<64x32xbf16>
    %cst_25 = arith.constant dense<0.000000e+00> : vector<64x32xf32>
    %72 = tpu.matmul %70, %71, %cst_25 {dimension_numbers = #tpu.dot_dimension_numbers<[1], [0], [0], [1], [0, 0, 1, 1], [], []>} : vector<64x64xbf16>, vector<64x32xbf16>, vector<64x32xf32> -> vector<64x32xf32>
    %73 = vector.shape_cast %72 : vector<64x32xf32> to vector<4x16x32xf32>
    %cst_26 = arith.constant dense<0.000000e+00> : vector<16x32xf32>
    %74 = vector.multi_reduction <add>, %73, %cst_26 [0] : vector<4x16x32xf32> to vector<16x32xf32>
    %75 = arith.truncf %74 : vector<16x32xf32> to vector<16x32xbf16>
    %cst_27 = arith.constant dense<0.000000e+00> : vector<16x32xf32>
    %76 = tpu.matmul %75, %13, %cst_27 {dimension_numbers = #tpu.dot_dimension_numbers<[1], [0], [0], [1], [0, 0, 1, 1], [], []>} : vector<16x32xbf16>, vector<32x32xbf16>, vector<16x32xf32> -> vector<16x32xf32>
    %77 = arith.addf %0, %76 : vector<16x32xf32>
    %78 = arith.mulf %77, %77 : vector<16x32xf32>
    %cst_28 = arith.constant dense<0.000000e+00> : vector<16xf32>
    %79 = vector.multi_reduction <add>, %78, %cst_28 [1] : vector<16x32xf32> to vector<16xf32>
    %80 = vector.shape_cast %79 : vector<16xf32> to vector<16x1xf32>
    %cst_29 = arith.constant 3.200000e+01 : f32
    %81 = vector.broadcast %cst_29 : f32 to vector<16x1xf32>
    %82 = arith.divf %80, %81 : vector<16x1xf32>
    %cst_30 = arith.constant 9.99999997E-7 : f32
    %83 = vector.broadcast %cst_30 : f32 to vector<16x1xf32>
    %84 = arith.addf %82, %83 : vector<16x1xf32>
    %85 = math.rsqrt %84 : vector<16x1xf32>
    %86 = vector.broadcast %85 : vector<16x1xf32> to vector<16x32xf32>
    %87 = arith.mulf %77, %86 : vector<16x32xf32>
    %88 = vector.broadcast %7 : vector<1x32xf32> to vector<16x32xf32>
    %89 = arith.mulf %87, %88 : vector<16x32xf32>
    %90 = arith.truncf %89 : vector<16x32xf32> to vector<16x32xbf16>
    %cst_31 = arith.constant dense<0.000000e+00> : vector<16x128xf32>
    %91 = tpu.matmul %90, %11, %cst_31 {dimension_numbers = #tpu.dot_dimension_numbers<[1], [0], [0], [1], [0, 0, 1, 1], [], []>} : vector<16x32xbf16>, vector<32x128xbf16>, vector<16x128xf32> -> vector<16x128xf32>
    %92 = vector.extract_strided_slice %91 {offsets = [0, 0], sizes = [16, 64], strides = [1, 1]} : vector<16x128xf32> to vector<16x64xf32>
    %93 = vector.extract_strided_slice %91 {offsets = [0, 64], sizes = [16, 64], strides = [1, 1]} : vector<16x128xf32> to vector<16x64xf32>
    %cst_32 = arith.constant 5.000000e-01 : f32
    %94 = vector.broadcast %cst_32 : f32 to vector<16x64xf32>
    %95 = arith.mulf %94, %92 : vector<16x64xf32>
    %96 = math.tanh %95 : vector<16x64xf32>
    %cst_33 = arith.constant 1.000000e+00 : f32
    %97 = vector.broadcast %cst_33 : f32 to vector<16x64xf32>
    %98 = arith.addf %97, %96 : vector<16x64xf32>
    %cst_34 = arith.constant 5.000000e-01 : f32
    %99 = vector.broadcast %cst_34 : f32 to vector<16x64xf32>
    %100 = arith.mulf %99, %98 : vector<16x64xf32>
    %101 = arith.mulf %92, %100 : vector<16x64xf32>
    %102 = arith.mulf %101, %93 : vector<16x64xf32>
    %103 = arith.truncf %102 : vector<16x64xf32> to vector<16x64xbf16>
    %cst_35 = arith.constant dense<0.000000e+00> : vector<16x32xf32>
    %104 = tpu.matmul %103, %15, %cst_35 {dimension_numbers = #tpu.dot_dimension_numbers<[1], [0], [0], [1], [0, 0, 1, 1], [], []>} : vector<16x64xbf16>, vector<64x32xbf16>, vector<16x32xf32> -> vector<16x32xf32>
    %105 = arith.addf %77, %104 : vector<16x32xf32>
    %c38 = arith.constant 38 : index
    %c0_36 = arith.constant 0 : index
    %106 = vector.load %arg1[%c38, %c0_36] : memref<41x32xf32, #tpu.memory_space<vmem>>, vector<1x32xf32>
    %c39 = arith.constant 39 : index
    %c0_37 = arith.constant 0 : index
    %107 = vector.load %arg1[%c39, %c0_37] : memref<41x32xf32, #tpu.memory_space<vmem>>, vector<1x32xf32>
    %c1 = arith.constant 1 : index
    %c0_38 = arith.constant 0 : index
    %c0_39 = arith.constant 0 : index
    %108 = vector.load %arg3[%c1, %c0_38, %c0_39] : memref<2x64x448xbf16, #tpu.memory_space<vmem>>, vector<1x32x160xbf16>
    %109 = vector.shape_cast %108 : vector<1x32x160xbf16> to vector<32x160xbf16>
    %c1_40 = arith.constant 1 : index
    %c0_41 = arith.constant 0 : index
    %c256_42 = arith.constant 256 : index
    %110 = vector.load %arg3[%c1_40, %c0_41, %c256_42] : memref<2x64x448xbf16, #tpu.memory_space<vmem>>, vector<1x32x128xbf16>
    %111 = vector.shape_cast %110 : vector<1x32x128xbf16> to vector<32x128xbf16>
    %c1_43 = arith.constant 1 : index
    %c0_44 = arith.constant 0 : index
    %c384_45 = arith.constant 384 : index
    %112 = vector.load %arg3[%c1_43, %c0_44, %c384_45] : memref<2x64x448xbf16, #tpu.memory_space<vmem>>, vector<1x32x32xbf16>
    %113 = vector.shape_cast %112 : vector<1x32x32xbf16> to vector<32x32xbf16>
    %c1_46 = arith.constant 1 : index
    %c0_47 = arith.constant 0 : index
    %c416_48 = arith.constant 416 : index
    %114 = vector.load %arg3[%c1_46, %c0_47, %c416_48] : memref<2x64x448xbf16, #tpu.memory_space<vmem>>, vector<1x64x32xbf16>
    %115 = vector.shape_cast %114 : vector<1x64x32xbf16> to vector<64x32xbf16>
    %116 = arith.mulf %105, %105 : vector<16x32xf32>
    %cst_49 = arith.constant dense<0.000000e+00> : vector<16xf32>
    %117 = vector.multi_reduction <add>, %116, %cst_49 [1] : vector<16x32xf32> to vector<16xf32>
    %118 = vector.shape_cast %117 : vector<16xf32> to vector<16x1xf32>
    %cst_50 = arith.constant 3.200000e+01 : f32
    %119 = vector.broadcast %cst_50 : f32 to vector<16x1xf32>
    %120 = arith.divf %118, %119 : vector<16x1xf32>
    %cst_51 = arith.constant 9.99999997E-7 : f32
    %121 = vector.broadcast %cst_51 : f32 to vector<16x1xf32>
    %122 = arith.addf %120, %121 : vector<16x1xf32>
    %123 = math.rsqrt %122 : vector<16x1xf32>
    %124 = vector.broadcast %123 : vector<16x1xf32> to vector<16x32xf32>
    %125 = arith.mulf %105, %124 : vector<16x32xf32>
    %126 = vector.broadcast %106 : vector<1x32xf32> to vector<16x32xf32>
    %127 = arith.mulf %125, %126 : vector<16x32xf32>
    %128 = arith.truncf %127 : vector<16x32xf32> to vector<16x32xbf16>
    %cst_52 = arith.constant dense<0.000000e+00> : vector<16x160xf32>
    %129 = tpu.matmul %128, %109, %cst_52 {dimension_numbers = #tpu.dot_dimension_numbers<[1], [0], [0], [1], [0, 0, 1, 1], [], []>} : vector<16x32xbf16>, vector<32x160xbf16>, vector<16x160xf32> -> vector<16x160xf32>
    %130 = vector.extract_strided_slice %129 {offsets = [0, 0], sizes = [16, 32], strides = [1, 1]} : vector<16x160xf32> to vector<16x32xf32>
    %131 = vector.extract_strided_slice %129 {offsets = [0, 32], sizes = [16, 32], strides = [1, 1]} : vector<16x160xf32> to vector<16x32xf32>
    %132 = vector.extract_strided_slice %129 {offsets = [0, 64], sizes = [16, 32], strides = [1, 1]} : vector<16x160xf32> to vector<16x32xf32>
    %133 = vector.extract_strided_slice %129 {offsets = [0, 96], sizes = [16, 32], strides = [1, 1]} : vector<16x160xf32> to vector<16x32xf32>
    %134 = vector.extract_strided_slice %129 {offsets = [0, 128], sizes = [16, 32], strides = [1, 1]} : vector<16x160xf32> to vector<16x32xf32>
    %135 = arith.mulf %130, %1 : vector<16x32xf32>
    %136 = arith.mulf %131, %2 : vector<16x32xf32>
    %137 = arith.addf %135, %136 : vector<16x32xf32>
    %138 = arith.mulf %132, %1 : vector<16x32xf32>
    %139 = arith.mulf %133, %2 : vector<16x32xf32>
    %140 = arith.addf %138, %139 : vector<16x32xf32>
    %141 = vector.shape_cast %137 : vector<16x32xf32> to vector<1x16x32xf32>
    %142 = vector.broadcast %141 : vector<1x16x32xf32> to vector<4x16x32xf32>
    %143 = vector.shape_cast %142 : vector<4x16x32xf32> to vector<64x32xf32>
    %144 = vector.shape_cast %140 : vector<16x32xf32> to vector<1x16x32xf32>
    %145 = vector.broadcast %144 : vector<1x16x32xf32> to vector<4x16x32xf32>
    %146 = vector.broadcast %4 : vector<4x1x32xf32> to vector<4x16x32xf32>
    %147 = arith.mulf %145, %146 : vector<4x16x32xf32>
    %148 = vector.shape_cast %147 : vector<4x16x32xf32> to vector<64x32xf32>
    %149 = vector.shape_cast %134 : vector<16x32xf32> to vector<1x16x32xf32>
    %150 = vector.broadcast %149 : vector<1x16x32xf32> to vector<4x16x32xf32>
    %151 = vector.broadcast %4 : vector<4x1x32xf32> to vector<4x16x32xf32>
    %152 = arith.mulf %150, %151 : vector<4x16x32xf32>
    %153 = vector.shape_cast %152 : vector<4x16x32xf32> to vector<64x32xf32>
    %154 = arith.truncf %143 : vector<64x32xf32> to vector<64x32xbf16>
    %155 = arith.truncf %148 : vector<64x32xf32> to vector<64x32xbf16>
    %cst_53 = arith.constant dense<0.000000e+00> : vector<64x64xf32>
    %156 = tpu.matmul %154, %155, %cst_53 {dimension_numbers = #tpu.dot_dimension_numbers<[1], [1], [0], [0], [0, 0, 1, 0], [], []>} : vector<64x32xbf16>, vector<64x32xbf16>, vector<64x64xf32> -> vector<64x64xf32>
    %cst_54 = arith.constant 0.353553385 : f32
    %157 = vector.broadcast %cst_54 : f32 to vector<64x64xf32>
    %158 = arith.mulf %156, %157 : vector<64x64xf32>
    %159 = arith.addf %158, %5 : vector<64x64xf32>
    %cst_55 = arith.constant dense<0xFF800000> : vector<64xf32>
    %160 = vector.multi_reduction <maximumf>, %159, %cst_55 [1] : vector<64x64xf32> to vector<64xf32>
    %161 = vector.shape_cast %160 : vector<64xf32> to vector<64x1xf32>
    %162 = vector.broadcast %161 : vector<64x1xf32> to vector<64x64xf32>
    %163 = arith.subf %159, %162 : vector<64x64xf32>
    %164 = math.exp %163 : vector<64x64xf32>
    %cst_56 = arith.constant dense<0.000000e+00> : vector<64xf32>
    %165 = vector.multi_reduction <add>, %164, %cst_56 [1] : vector<64x64xf32> to vector<64xf32>
    %166 = vector.shape_cast %165 : vector<64xf32> to vector<64x1xf32>
    %167 = tpu.reciprocal %166 {approx = true} : vector<64x1xf32> -> vector<64x1xf32>
    %168 = vector.broadcast %167 : vector<64x1xf32> to vector<64x64xf32>
    %169 = arith.mulf %164, %168 : vector<64x64xf32>
    %170 = arith.truncf %169 : vector<64x64xf32> to vector<64x64xbf16>
    %171 = arith.truncf %153 : vector<64x32xf32> to vector<64x32xbf16>
    %cst_57 = arith.constant dense<0.000000e+00> : vector<64x32xf32>
    %172 = tpu.matmul %170, %171, %cst_57 {dimension_numbers = #tpu.dot_dimension_numbers<[1], [0], [0], [1], [0, 0, 1, 1], [], []>} : vector<64x64xbf16>, vector<64x32xbf16>, vector<64x32xf32> -> vector<64x32xf32>
    %173 = vector.shape_cast %172 : vector<64x32xf32> to vector<4x16x32xf32>
    %cst_58 = arith.constant dense<0.000000e+00> : vector<16x32xf32>
    %174 = vector.multi_reduction <add>, %173, %cst_58 [0] : vector<4x16x32xf32> to vector<16x32xf32>
    %175 = arith.truncf %174 : vector<16x32xf32> to vector<16x32xbf16>
    %cst_59 = arith.constant dense<0.000000e+00> : vector<16x32xf32>
    %176 = tpu.matmul %175, %113, %cst_59 {dimension_numbers = #tpu.dot_dimension_numbers<[1], [0], [0], [1], [0, 0, 1, 1], [], []>} : vector<16x32xbf16>, vector<32x32xbf16>, vector<16x32xf32> -> vector<16x32xf32>
    %177 = arith.addf %105, %176 : vector<16x32xf32>
    %178 = arith.mulf %177, %177 : vector<16x32xf32>
    %cst_60 = arith.constant dense<0.000000e+00> : vector<16xf32>
    %179 = vector.multi_reduction <add>, %178, %cst_60 [1] : vector<16x32xf32> to vector<16xf32>
    %180 = vector.shape_cast %179 : vector<16xf32> to vector<16x1xf32>
    %cst_61 = arith.constant 3.200000e+01 : f32
    %181 = vector.broadcast %cst_61 : f32 to vector<16x1xf32>
    %182 = arith.divf %180, %181 : vector<16x1xf32>
    %cst_62 = arith.constant 9.99999997E-7 : f32
    %183 = vector.broadcast %cst_62 : f32 to vector<16x1xf32>
    %184 = arith.addf %182, %183 : vector<16x1xf32>
    %185 = math.rsqrt %184 : vector<16x1xf32>
    %186 = vector.broadcast %185 : vector<16x1xf32> to vector<16x32xf32>
    %187 = arith.mulf %177, %186 : vector<16x32xf32>
    %188 = vector.broadcast %107 : vector<1x32xf32> to vector<16x32xf32>
    %189 = arith.mulf %187, %188 : vector<16x32xf32>
    %190 = arith.truncf %189 : vector<16x32xf32> to vector<16x32xbf16>
    %cst_63 = arith.constant dense<0.000000e+00> : vector<16x128xf32>
    %191 = tpu.matmul %190, %111, %cst_63 {dimension_numbers = #tpu.dot_dimension_numbers<[1], [0], [0], [1], [0, 0, 1, 1], [], []>} : vector<16x32xbf16>, vector<32x128xbf16>, vector<16x128xf32> -> vector<16x128xf32>
    %192 = vector.extract_strided_slice %191 {offsets = [0, 0], sizes = [16, 64], strides = [1, 1]} : vector<16x128xf32> to vector<16x64xf32>
    %193 = vector.extract_strided_slice %191 {offsets = [0, 64], sizes = [16, 64], strides = [1, 1]} : vector<16x128xf32> to vector<16x64xf32>
    %cst_64 = arith.constant 5.000000e-01 : f32
    %194 = vector.broadcast %cst_64 : f32 to vector<16x64xf32>
    %195 = arith.mulf %194, %192 : vector<16x64xf32>
    %196 = math.tanh %195 : vector<16x64xf32>
    %cst_65 = arith.constant 1.000000e+00 : f32
    %197 = vector.broadcast %cst_65 : f32 to vector<16x64xf32>
    %198 = arith.addf %197, %196 : vector<16x64xf32>
    %cst_66 = arith.constant 5.000000e-01 : f32
    %199 = vector.broadcast %cst_66 : f32 to vector<16x64xf32>
    %200 = arith.mulf %199, %198 : vector<16x64xf32>
    %201 = arith.mulf %192, %200 : vector<16x64xf32>
    %202 = arith.mulf %201, %193 : vector<16x64xf32>
    %203 = arith.truncf %202 : vector<16x64xf32> to vector<16x64xbf16>
    %cst_67 = arith.constant dense<0.000000e+00> : vector<16x32xf32>
    %204 = tpu.matmul %203, %115, %cst_67 {dimension_numbers = #tpu.dot_dimension_numbers<[1], [0], [0], [1], [0, 0, 1, 1], [], []>} : vector<16x64xbf16>, vector<64x32xbf16>, vector<16x32xf32> -> vector<16x32xf32>
    %205 = arith.addf %177, %204 : vector<16x32xf32>
    %c40 = arith.constant 40 : index
    %c0_68 = arith.constant 0 : index
    %206 = vector.load %arg1[%c40, %c0_68] : memref<41x32xf32, #tpu.memory_space<vmem>>, vector<1x32xf32>
    %207 = arith.mulf %205, %205 : vector<16x32xf32>
    %cst_69 = arith.constant dense<0.000000e+00> : vector<16xf32>
    %208 = vector.multi_reduction <add>, %207, %cst_69 [1] : vector<16x32xf32> to vector<16xf32>
    %209 = vector.shape_cast %208 : vector<16xf32> to vector<16x1xf32>
    %cst_70 = arith.constant 3.200000e+01 : f32
    %210 = vector.broadcast %cst_70 : f32 to vector<16x1xf32>
    %211 = arith.divf %209, %210 : vector<16x1xf32>
    %cst_71 = arith.constant 9.99999997E-7 : f32
    %212 = vector.broadcast %cst_71 : f32 to vector<16x1xf32>
    %213 = arith.addf %211, %212 : vector<16x1xf32>
    %214 = math.rsqrt %213 : vector<16x1xf32>
    %215 = vector.broadcast %214 : vector<16x1xf32> to vector<16x32xf32>
    %216 = arith.mulf %205, %215 : vector<16x32xf32>
    %217 = vector.broadcast %206 : vector<1x32xf32> to vector<16x32xf32>
    %218 = arith.mulf %216, %217 : vector<16x32xf32>
    %219 = arith.truncf %218 : vector<16x32xf32> to vector<16x32xbf16>
    %c0_72 = arith.constant 0 : index
    %c0_73 = arith.constant 0 : index
    %220 = vector.load %arg4[%c0_72, %c0_73] : memref<32x128xbf16, #tpu.memory_space<vmem>>, vector<32x128xbf16>
    %cst_74 = arith.constant dense<0.000000e+00> : vector<16x128xf32>
    %221 = tpu.matmul %219, %220, %cst_74 {dimension_numbers = #tpu.dot_dimension_numbers<[1], [0], [0], [1], [0, 0, 1, 1], [], []>} : vector<16x32xbf16>, vector<32x128xbf16>, vector<16x128xf32> -> vector<16x128xf32>
    %c0_75 = arith.constant 0 : index
    %c0_76 = arith.constant 0 : index
    %222 = vector.load %arg5[%c0_75, %c0_76] : memref<16x128xf32, #tpu.memory_space<vmem>>, vector<16x128xf32>
    tpu.vector_store %arg5[%c0_75, %c0_76], %221 {strides = array<i32>} : memref<16x128xf32, #tpu.memory_space<vmem>>, vector<16x128xf32>,
    return
  }
}

</mosaic_0001>

<llo_original>
// kernel: llama2_top_mocker_forward.1
$region0: #{llama2_top_mocker_forward.1}
  #allocation0 [shape = 'u32[]', space=smem, size = 0x4, offset = 0x4, fixed_abs, tag = 'smem constant byte address 0x4 - core index']
  #allocation1 [shape = 'u32[144,128]{1,0:T(1,128)}', space=vmem, size = 0x12000, scoped, tag = 'internal scratch']
  %s0 = inlined_call_operand.vmem [shape: f32[16,32], index: 0, kind: input, shape index: {}]
  %s1 = inlined_call_operand.vmem [shape: f32[41,32], index: 1, kind: input, shape index: {}]
  %s2 = inlined_call_operand.vmem [shape: f32[64,64], index: 2, kind: input, shape index: {}]
  %s3 = inlined_call_operand.hbm [shape: bf16[2,64,448], index: 3, kind: input, shape index: {}]
  %s4 = inlined_call_operand.hbm [shape: bf16[32,128], index: 4, kind: input, shape index: {}]
  %s5 = inlined_call_operand.hbm [shape: f32[16,128], index: 5, kind: output, shape index: {}]
  %s6 = sld [smem:[#allocation0]]
  $region38: #{llama2_top_mocker_forward.1} parent=0
    _
  %s8 = ssub.s32 1, %s6
  %s9 = scalar_select 0, %s8, %s6
  $region1: #{llama2_top_mocker_forward.1} parent=0
    #allocation2 [shape = 'u8[131072]{0}', space=vmem, size = 0x20000, scoped, tag = 'input window, operand 3, single buffered']
    #allocation3 [shape = 's32[1]{0}', space=sflag, size = 0x4, scoped, tag = 'scoped memory for llama2_top_mocker_forward.1']
    #allocation4 [shape = 's32[1]{0}', space=sflag, size = 0x4, scoped, tag = 'scoped memory for llama2_top_mocker_forward.1']
    #allocation5 [shape = 'u8[8192]{0}', space=vmem, size = 0x2000, scoped, tag = 'input window, operand 4, single buffered']
    #allocation6 [shape = 's32[1]{0}', space=sflag, size = 0x4, scoped, tag = 'scoped memory for llama2_top_mocker_forward.1']
    #allocation7 [shape = 'u8[8192]{0}', space=vmem, size = 0x2000, scoped, tag = 'output window, operand 0, single buffered']
    %10 = vsyncpa [#allocation3], 0
    %11 = vsyncpa [#allocation6], 0
    %12 = vsyncpa [#allocation4], 0
    // Predicated region
    $region2: #{llama2_top_mocker_forward.1} parent=1 // pred_check
      _
    $region3: #{llama2_top_mocker_forward.1} parent=1 // pred_check_branch
      %14 = sbr.rel (0) target = $region5
    $region4: #{llama2_top_mocker_forward.1} parent=1 // pred_region
      _
    $region5: #{llama2_top_mocker_forward.1} parent=1 // pred_fallthru
      _
    // Predicated region
    $region6: #{llama2_top_mocker_forward.1} parent=1 // pred_check
      _
    $region7: #{llama2_top_mocker_forward.1} parent=1 // pred_check_branch
      %16 = sbr.rel (0) target = $region9
    $region8: #{llama2_top_mocker_forward.1} parent=1 // pred_region
      _
    $region9: #{llama2_top_mocker_forward.1} parent=1 // pred_fallthru
      _
    // Predicated region
    $region10: #{llama2_top_mocker_forward.1} parent=1 // pred_check
      _
    $region11: #{llama2_top_mocker_forward.1} parent=1 // pred_check_branch
      %18 = sbr.rel (0) target = $region13
    $region12: #{llama2_top_mocker_forward.1} parent=1 // pred_region
      _
    $region13: #{llama2_top_mocker_forward.1} parent=1 // pred_fallthru
      _
    // Predicated region
    $region14: #{llama2_top_mocker_forward.1} parent=1 // pred_check
      _
    $region15: #{llama2_top_mocker_forward.1} parent=1 // pred_check_branch
      %20 = sbr.rel (0) target = $region17
    $region16: #{llama2_top_mocker_forward.1} parent=1 // pred_region
      %s22 = ssub.s32 4096, 4096
      %23 = vsyncadd [#allocation3], %s22
      %s24 = sshll.u32 [#allocation2], 4
      %s25 = int_to_ptr.vmem [resolvable:$true] %s24
      %30 = dma.hbm_to_vmem [thread:$0]  %s3, 4096, %s25, [#allocation3], 256, 256, 16
    $region17: #{llama2_top_mocker_forward.1} parent=1 // pred_fallthru
      _
    // Predicated region
    $region18: #{llama2_top_mocker_forward.1} parent=1 // pred_check
      _
    $region19: #{llama2_top_mocker_forward.1} parent=1 // pred_check_branch
      %32 = sbr.rel (0) target = $region21
    $region20: #{llama2_top_mocker_forward.1} parent=1 // pred_region
      %s34 = ssub.s32 256, 256
      %35 = vsyncadd [#allocation6], %s34
      %s36 = sshll.u32 [#allocation5], 4
      %s37 = int_to_ptr.vmem [resolvable:$true] %s36
      %42 = dma.hbm_to_vmem [thread:$0]  %s4, 256, %s37, [#allocation6], 64, 64, 4
    $region21: #{llama2_top_mocker_forward.1} parent=1 // pred_fallthru
      _
    // Predicated region
    $region22: #{llama2_top_mocker_forward.1} parent=1 // pred_check
      _
    $region23: #{llama2_top_mocker_forward.1} parent=1 // pred_check_branch
      %44 = sbr.rel (0) target = $region25
    $region24: #{llama2_top_mocker_forward.1} parent=1 // pred_region
      %45 = dma.done [#allocation3], 4096
    $region25: #{llama2_top_mocker_forward.1} parent=1 // pred_fallthru
      _
    // Predicated region
    $region26: #{llama2_top_mocker_forward.1} parent=1 // pred_check
      _
    $region27: #{llama2_top_mocker_forward.1} parent=1 // pred_check_branch
      %47 = sbr.rel (0) target = $region29
    $region28: #{llama2_top_mocker_forward.1} parent=1 // pred_region
      %48 = dma.done [#allocation6], 256
    $region29: #{llama2_top_mocker_forward.1} parent=1 // pred_fallthru
      _
    %v50 = vld [vmem:[%s0] sm:$0xff]
    %v51 = vld [vmem:[%s0 + $0x8] sm:$0xff]
    %v52 = vld [vmem:[%s1] sm:$0xff]
    %v53 = vld [vmem:[%s1 + $0x8] sm:$0xff]
    %v54 = vld [vmem:[%s1 + $0x10] sm:$0xff]
    %v55 = vld [vmem:[%s1 + $0x18] sm:$0xff]
    %v56 = vld [vmem:[%s1 + $0x20] sm:$0xf]
    %v59 = vunpack.c.l.s4 1966171168
    %v60 = vunpack.c.0.s8 %v59
    %v61 = vlaneseq
    %v62 = vshrl.u32 %v61, 7
    %v63 = vsub.s32 %v60, %v62
    %v64 = vrot.slane %v56, %v63
    %v65 = vcombine.high %v64, %v64
    %v67 = vunpack.c.l.s4 1966171168
    %v68 = vunpack.c.0.s8 %v67
    %v69 = vlaneseq
    %v70 = vshrl.u32 %v69, 7
    %v71 = vsub.s32 %v68, %v70
    %v72 = vrot.slane %v64, %v71
    %v74 = vunpack.c.l.s4 1966171168
    %v75 = vunpack.c.0.s8 %v74
    %v76 = vlaneseq
    %v77 = vshrl.u32 %v76, 7
    %v78 = vsub.s32 %v75, %v77
    %v79 = vrot.slane %v65, %v78
    %v80 = vcombine.high %v72, %v72
    %v81 = vcombine.high %v79, %v79
    %v82 = vld [vmem:[%s2] sm:$0xff]
    %v83 = vld [vmem:[%s2 + $0x8] sm:$0xff]
    %v84 = vld [vmem:[%s2 + $0x10] sm:$0xff]
    %v85 = vld [vmem:[%s2 + $0x18] sm:$0xff]
    %v86 = vld [vmem:[%s2 + $0x20] sm:$0xff]
    %v87 = vld [vmem:[%s2 + $0x28] sm:$0xff]
    %v88 = vld [vmem:[%s2 + $0x30] sm:$0xff]
    %v89 = vld [vmem:[%s2 + $0x38] sm:$0xff]
    %v90 = vld [vmem:[%s1 + $0x24] sm:$0x1]
    %v91 = vld [vmem:[%s1 + $0x25] sm:$0x1]
    %v92 = vld [vmem:[#allocation2] sm:$0xff]
    %v93 = vld [vmem:[#allocation2 + $0x10] sm:$0xff]
    %v94 = vld [vmem:[#allocation2 + $0x20] sm:$0xff]
    %v95 = vld [vmem:[#allocation2 + $0x30] sm:$0xff]
    %v96 = vld [vmem:[#allocation2 + $0x8] sm:$0xf]
    %v97 = vld [vmem:[#allocation2 + $0x18] sm:$0xf]
    %v98 = vld [vmem:[#allocation2 + $0x28] sm:$0xf]
    %v99 = vld [vmem:[#allocation2 + $0x38] sm:$0xf]
    %v100 = vld [vmem:[#allocation2 + $0xc] sm:$0xf]
    %v101 = vld [vmem:[#allocation2 + $0x1c] sm:$0xf]
    %v102 = vld [vmem:[#allocation2 + $0x2c] sm:$0xf]
    %v103 = vld [vmem:[#allocation2 + $0x3c] sm:$0xf]
    %v104 = vld [vmem:[#allocation2 + $0x4c] sm:$0xf]
    %v105 = vld [vmem:[#allocation2 + $0x5c] sm:$0xf]
    %v106 = vld [vmem:[#allocation2 + $0x6c] sm:$0xf]
    %v107 = vld [vmem:[#allocation2 + $0x7c] sm:$0xf]
    %v108 = vmul.f32 %v50, %v50
    %v109 = vmul.f32 %v51, %v51
    %vm110 = vcmask 261120
    %v111 = vsel %vm110, %v108, 0.0
    %112 = vadd.xlane.f32.xlu0 %v111
    %v113 = vpop.xlane.xlu0 %112
    %v114 = vsel %vm110, %v109, 0.0
    %115 = vadd.xlane.f32.xlu0 %v114
    %v116 = vpop.xlane.xlu0 %115
    %v117 = vrcp.pop 32.0
    %v118 = vmul.f32 %v113, %v117
    %v119 = vmul.f32 %v116, %v117
    %v120 = vadd.f32 %v118, 1e-06
    %v121 = vadd.f32 %v119, 1e-06
    %v122 = vrsqrt.pop %v120
    %v123 = vrsqrt.pop %v121
    %v124 = vmul.f32 %v50, %v122
    %v125 = vmul.f32 %v51, %v123
    %v126 = vlaneseq
    %v127 = vshrl.u32 %v126, 7
    %v128 = vsub.s32 0, %v127
    %v129 = vrot.slane %v90, %v128
    %v130 = vmul.f32 %v124, %v129
    %v131 = vmul.f32 %v125, %v129
    %v132 = vpack.c.bf16 %v131, %v130
    %v137 = vunpack.c.l.b16 %v92
    %v138 = vunpack.c.h.b16 %v92
    %v139 = vunpack.c.l.b16 %v93
    %v140 = vunpack.c.h.b16 %v93
    %v141 = vunpack.c.l.b16 %v94
    %v142 = vunpack.c.h.b16 %v94
    %v143 = vunpack.c.l.b16 %v95
    %v144 = vunpack.c.h.b16 %v95
    %v145 = vpack.c.b16 %v139, %v137
    %v146 = vpack.c.b16 %v140, %v138
    %v147 = vpack.c.b16 %v143, %v141
    %v148 = vpack.c.b16 %v144, %v142
    %v154 = vsel %vm110, %v132, 0
    %156 = vmatprep.subr.bf16.mxu0 %v146
    %157 = vmatpush1.bf16.msra.mxu0 %v145
    %158 = vmatprep.subr.bf16.mxu0 %v148
    %159 = vmatpush1.bf16.msra.mxu0 %v147
    %160 = vmatprep.subr.bf16.mxu0 0
    %161 = vmatpush1.bf16.msra.mxu0 0
    %162 = vmatprep.subr.bf16.mxu0 0
    %163 = vmatpush1.bf16.msra.mxu0 0
    %164 = vmatprep.subr.bf16.mxu0 0
    %165 = vmatpush1.bf16.msra.mxu0 0
    %166 = vmatprep.subr.bf16.mxu0 0
    %167 = vmatpush1.bf16.msra.mxu0 0
    %168 = vmatprep.subr.bf16.mxu0 0
    %169 = vmatpush1.bf16.msra.mxu0 0
    %170 = vmatprep.subr.bf16.mxu0 0
    %171 = vmatpush1.bf16.msra.mxu0 0
    %172 = vmatprep.subr.bf16.mxu0 0
    %173 = vmatpush1.bf16.msra.mxu0 0
    %174 = vmatprep.subr.bf16.mxu0 0
    %175 = vmatpush1.bf16.msra.mxu0 0
    %176 = vmatprep.subr.bf16.mxu0 0
    %177 = vmatpush1.bf16.msra.mxu0 0
    %178 = vmatprep.subr.bf16.mxu0 0
    %179 = vmatpush1.bf16.msra.mxu0 0
    %180 = vmatprep.subr.bf16.mxu0 0
    %181 = vmatpush1.bf16.msra.mxu0 0
    %182 = vmatprep.subr.bf16.mxu0 0
    %183 = vmatpush1.bf16.msra.mxu0 0
    %184 = vmatprep.subr.bf16.mxu0 0
    %185 = vmatpush1.bf16.msra.mxu0 0
    %186 = vmatprep.subr.bf16.mxu0 0
    %187 = vmatpush1.bf16.msra.mxu0 0
    %188 = vmatprep.mubr.bf16.mxu0 0
    %189 = vmatmul.mubr.bf16.gmra.mrb[0].mxu0 %v154
    %v190 = vpop.f32.mrb[0].mxu0
    %v191 = vadd.f32 0.0, %v190
    %v192 = vpop.f32.mrb[0].mxu0
    %v193 = vadd.f32 0.0, %v192
    %v194 = vpop.f32.mrb[0].mxu0
    %v195 = vadd.f32 0.0, %v194
    %v196 = vpop.f32.mrb[0].mxu0
    %v197 = vadd.f32 0.0, %v196
    %198 = vdwg.mxu0
    %v199 = vmul.f32 %v191, %v52
    %v200 = vmul.f32 %v195, %v53
    %203 = vrot.lane.b32.xlu0 %v54, 32
    %v204 = vpop.permute.xlu0 %203
    %205 = vrot.lane.b32.xlu0 %v55, 32
    %v206 = vpop.permute.xlu0 %205
    %v209 = vmul.f32 %v191, %v204
    %v210 = vmul.f32 %v195, %v206
    %213 = vrot.lane.b32.xlu0 %v209, 96
    %v214 = vpop.permute.xlu0 %213
    %215 = vrot.lane.b32.xlu0 %v210, 96
    %v216 = vpop.permute.xlu0 %215
    %v219 = vadd.f32 %v199, %v214
    %v220 = vadd.f32 %v200, %v216
    %223 = vrot.lane.b32.xlu0 %v52, 64
    %v224 = vpop.permute.xlu0 %223
    %225 = vrot.lane.b32.xlu0 %v53, 64
    %v226 = vpop.permute.xlu0 %225
    %v229 = vmul.f32 %v191, %v224
    %v230 = vmul.f32 %v195, %v226
    %231 = vrot.lane.b32.xlu0 %v54, 96
    %v232 = vpop.permute.xlu0 %231
    %233 = vrot.lane.b32.xlu0 %v55, 96
    %v234 = vpop.permute.xlu0 %233
    %v237 = vmul.f32 %v191, %v232
    %v238 = vmul.f32 %v195, %v234
    %241 = vrot.lane.b32.xlu0 %v237, 96
    %v242 = vpop.permute.xlu0 %241
    %243 = vrot.lane.b32.xlu0 %v238, 96
    %v244 = vpop.permute.xlu0 %243
    %v247 = vadd.f32 %v229, %v242
    %v248 = vadd.f32 %v230, %v244
    %v249 = vlaneseq
    %v250 = vshrl.u32 %v249, 7
    %v251 = vsub.s32 0, %v250
    %v252 = vrot.slane %v72, %v251
    %v253 = vlaneseq
    %v254 = vshrl.u32 %v253, 7
    %v255 = vsub.s32 0, %v254
    %v256 = vrot.slane %v79, %v255
    %v257 = vlaneseq
    %v258 = vshrl.u32 %v257, 7
    %v259 = vsub.s32 0, %v258
    %v260 = vrot.slane %v80, %v259
    %v261 = vlaneseq
    %v262 = vshrl.u32 %v261, 7
    %v263 = vsub.s32 0, %v262
    %v264 = vrot.slane %v81, %v263
    %269 = vrot.lane.b32.xlu0 %v252, 64
    %v270 = vpop.permute.xlu0 %269
    %271 = vrot.lane.b32.xlu0 %v256, 64
    %v272 = vpop.permute.xlu0 %271
    %273 = vrot.lane.b32.xlu0 %v260, 64
    %v274 = vpop.permute.xlu0 %273
    %275 = vrot.lane.b32.xlu0 %v264, 64
    %v276 = vpop.permute.xlu0 %275
    %v281 = vmul.f32 %v247, %v270
    %v282 = vmul.f32 %v248, %v270
    %v283 = vmul.f32 %v247, %v272
    %v284 = vmul.f32 %v248, %v272
    %v285 = vmul.f32 %v247, %v274
    %v286 = vmul.f32 %v248, %v274
    %v287 = vmul.f32 %v247, %v276
    %v288 = vmul.f32 %v248, %v276
    %v289 = vmul.f32 %v193, %v252
    %v290 = vmul.f32 %v197, %v252
    %v291 = vmul.f32 %v193, %v256
    %v292 = vmul.f32 %v197, %v256
    %v293 = vmul.f32 %v193, %v260
    %v294 = vmul.f32 %v197, %v260
    %v295 = vmul.f32 %v193, %v264
    %v296 = vmul.f32 %v197, %v264
    %v297 = vpack.c.bf16 %v220, %v219
    %v298 = vpack.c.bf16 %v282, %v281
    %v299 = vpack.c.bf16 %v284, %v283
    %v300 = vpack.c.bf16 %v286, %v285
    %v301 = vpack.c.bf16 %v288, %v287
    %306 = vrot.lane.b32.xlu0 %v298, 64
    %v307 = vpop.permute.xlu0 %306
    %308 = vrot.lane.b32.xlu0 %v299, 64
    %v309 = vpop.permute.xlu0 %308
    %310 = vrot.lane.b32.xlu0 %v300, 64
    %v311 = vpop.permute.xlu0 %310
    %312 = vrot.lane.b32.xlu0 %v301, 64
    %v313 = vpop.permute.xlu0 %312
    %v315 = vsel %vm110, %v297, 0
    %v318 = vsel %vm110, %v307, 0
    %v321 = vsel %vm110, %v309, 0
    %v324 = vsel %vm110, %v311, 0
    %v327 = vsel %vm110, %v313, 0
    %329 = vmatprep.subr.bf16.mxu0 0
    %330 = vmatpush1.bf16.xpose.msra.mxu0 %v318
    %331 = vmatprep.subr.bf16.mxu0 0
    %332 = vmatpush1.bf16.xpose.msra.mxu0 %v321
    %333 = vmatprep.subr.bf16.mxu0 0
    %334 = vmatpush1.bf16.xpose.msra.mxu0 %v324
    %335 = vmatprep.subr.bf16.mxu0 0
    %336 = vmatpush1.bf16.xpose.msra.mxu0 %v327
    %337 = vmatprep.subr.bf16.mxu0 0
    %338 = vmatpush1.bf16.xpose.msra.mxu0 0
    %339 = vmatprep.subr.bf16.mxu0 0
    %340 = vmatpush1.bf16.xpose.msra.mxu0 0
    %341 = vmatprep.subr.bf16.mxu0 0
    %342 = vmatpush1.bf16.xpose.msra.mxu0 0
    %343 = vmatprep.subr.bf16.mxu0 0
    %344 = vmatpush1.bf16.xpose.msra.mxu0 0
    %345 = vmatprep.subr.bf16.mxu0 0
    %346 = vmatpush1.bf16.xpose.msra.mxu0 0
    %347 = vmatprep.subr.bf16.mxu0 0
    %348 = vmatpush1.bf16.xpose.msra.mxu0 0
    %349 = vmatprep.subr.bf16.mxu0 0
    %350 = vmatpush1.bf16.xpose.msra.mxu0 0
    %351 = vmatprep.subr.bf16.mxu0 0
    %352 = vmatpush1.bf16.xpose.msra.mxu0 0
    %353 = vmatprep.subr.bf16.mxu0 0
    %354 = vmatpush1.bf16.xpose.msra.mxu0 0
    %355 = vmatprep.subr.bf16.mxu0 0
    %356 = vmatpush1.bf16.xpose.msra.mxu0 0
    %357 = vmatprep.subr.bf16.mxu0 0
    %358 = vmatpush1.bf16.xpose.msra.mxu0 0
    %359 = vmatprep.subr.bf16.mxu0 0
    %360 = vmatpush1.bf16.xpose.msra.mxu0 0
    %361 = vmatprep.mubr.bf16.mxu0 0
    %362 = vmatmul.mubr.bf16.gmra.mrb[0].mxu0 %v315
    %v363 = vpop.f32.mrb[0].mxu0
    %v364 = vadd.f32 0.0, %v363
    %v365 = vpop.f32.mrb[0].mxu0
    %v366 = vpop.f32.mrb[0].mxu0
    %v367 = vadd.f32 0.0, %v366
    %v368 = vpop.f32.mrb[0].mxu0
    %369 = vmatprep.mubr.bf16.mxu0 0
    %370 = vmatmul.mubr.bf16.gmra.mrb[0].mxu0 %v315
    %v371 = vpop.f32.mrb[0].mxu0
    %v372 = vadd.f32 0.0, %v371
    %v373 = vpop.f32.mrb[0].mxu0
    %v374 = vpop.f32.mrb[0].mxu0
    %v375 = vadd.f32 0.0, %v374
    %v376 = vpop.f32.mrb[0].mxu0
    %377 = vmatprep.mubr.bf16.mxu0 0
    %378 = vmatmul.mubr.bf16.gmra.mrb[0].mxu0 %v315
    %v379 = vpop.f32.mrb[0].mxu0
    %v380 = vadd.f32 0.0, %v379
    %v381 = vpop.f32.mrb[0].mxu0
    %v382 = vpop.f32.mrb[0].mxu0
    %v383 = vadd.f32 0.0, %v382
    %v384 = vpop.f32.mrb[0].mxu0
    %385 = vmatprep.mubr.bf16.mxu0 0
    %386 = vmatmul.mubr.bf16.gmra.mrb[0].mxu0 %v315
    %v387 = vpop.f32.mrb[0].mxu0
    %v388 = vadd.f32 0.0, %v387
    %v389 = vpop.f32.mrb[0].mxu0
    %v390 = vpop.f32.mrb[0].mxu0
    %v391 = vadd.f32 0.0, %v390
    %v392 = vpop.f32.mrb[0].mxu0
    %393 = vdwg.mxu0
    %v394 = vmul.f32 %v364, 0.35355338
    %v395 = vmul.f32 %v367, 0.35355338
    %v396 = vmul.f32 %v372, 0.35355338
    %v397 = vmul.f32 %v375, 0.35355338
    %v398 = vmul.f32 %v380, 0.35355338
    %v399 = vmul.f32 %v383, 0.35355338
    %v400 = vmul.f32 %v388, 0.35355338
    %v401 = vmul.f32 %v391, 0.35355338
    %v402 = vadd.f32 %v394, %v82
    %v403 = vadd.f32 %v395, %v83
    %v404 = vadd.f32 %v396, %v84
    %v405 = vadd.f32 %v397, %v85
    %v406 = vadd.f32 %v398, %v86
    %v407 = vadd.f32 %v399, %v87
    %v408 = vadd.f32 %v400, %v88
    %v409 = vadd.f32 %v401, %v89
    %vm410 = vcmask 523264
    %v411 = vsel %vm410, %v402, -inf
    %412 = vmax.xlane.f32.xlu0 %v411
    %v413 = vpop.xlane.xlu0 %412
    %v414 = vsel %vm410, %v403, -inf
    %415 = vmax.xlane.f32.xlu0 %v414
    %v416 = vpop.xlane.xlu0 %415
    %v417 = vsel %vm410, %v404, -inf
    %418 = vmax.xlane.f32.xlu0 %v417
    %v419 = vpop.xlane.xlu0 %418
    %v420 = vsel %vm410, %v405, -inf
    %421 = vmax.xlane.f32.xlu0 %v420
    %v422 = vpop.xlane.xlu0 %421
    %v423 = vsel %vm410, %v406, -inf
    %424 = vmax.xlane.f32.xlu0 %v423
    %v425 = vpop.xlane.xlu0 %424
    %v426 = vsel %vm410, %v407, -inf
    %427 = vmax.xlane.f32.xlu0 %v426
    %v428 = vpop.xlane.xlu0 %427
    %v429 = vsel %vm410, %v408, -inf
    %430 = vmax.xlane.f32.xlu0 %v429
    %v431 = vpop.xlane.xlu0 %430
    %v432 = vsel %vm410, %v409, -inf
    %433 = vmax.xlane.f32.xlu0 %v432
    %v434 = vpop.xlane.xlu0 %433
    %v435 = vsub.f32 %v402, %v413
    %v436 = vsub.f32 %v403, %v416
    %v437 = vsub.f32 %v404, %v419
    %v438 = vsub.f32 %v405, %v422
    %v439 = vsub.f32 %v406, %v425
    %v440 = vsub.f32 %v407, %v428
    %v441 = vsub.f32 %v408, %v431
    %v442 = vsub.f32 %v409, %v434
    %v443 = vmul.f32 %v435, 1.442695
    %v444 = vpow.pop %v443
    %v445 = vmul.f32 %v436, 1.442695
    %v446 = vpow.pop %v445
    %v447 = vmul.f32 %v437, 1.442695
    %v448 = vpow.pop %v447
    %v449 = vmul.f32 %v438, 1.442695
    %v450 = vpow.pop %v449
    %v451 = vmul.f32 %v439, 1.442695
    %v452 = vpow.pop %v451
    %v453 = vmul.f32 %v440, 1.442695
    %v454 = vpow.pop %v453
    %v455 = vmul.f32 %v441, 1.442695
    %v456 = vpow.pop %v455
    %v457 = vmul.f32 %v442, 1.442695
    %v458 = vpow.pop %v457
    %v459 = vsel %vm410, %v444, 0.0
    %460 = vadd.xlane.f32.xlu0 %v459
    %v461 = vpop.xlane.xlu0 %460
    %v462 = vsel %vm410, %v446, 0.0
    %463 = vadd.xlane.f32.xlu0 %v462
    %v464 = vpop.xlane.xlu0 %463
    %v465 = vsel %vm410, %v448, 0.0
    %466 = vadd.xlane.f32.xlu0 %v465
    %v467 = vpop.xlane.xlu0 %466
    %v468 = vsel %vm410, %v450, 0.0
    %469 = vadd.xlane.f32.xlu0 %v468
    %v470 = vpop.xlane.xlu0 %469
    %v471 = vsel %vm410, %v452, 0.0
    %472 = vadd.xlane.f32.xlu0 %v471
    %v473 = vpop.xlane.xlu0 %472
    %v474 = vsel %vm410, %v454, 0.0
    %475 = vadd.xlane.f32.xlu0 %v474
    %v476 = vpop.xlane.xlu0 %475
    %v477 = vsel %vm410, %v456, 0.0
    %478 = vadd.xlane.f32.xlu0 %v477
    %v479 = vpop.xlane.xlu0 %478
    %v480 = vsel %vm410, %v458, 0.0
    %481 = vadd.xlane.f32.xlu0 %v480
    %v482 = vpop.xlane.xlu0 %481
    %v483 = vrcp.pop %v461
    %v484 = vrcp.pop %v464
    %v485 = vrcp.pop %v467
    %v486 = vrcp.pop %v470
    %v487 = vrcp.pop %v473
    %v488 = vrcp.pop %v476
    %v489 = vrcp.pop %v479
    %v490 = vrcp.pop %v482
    %v491 = vmul.f32 %v444, %v483
    %v492 = vmul.f32 %v446, %v484
    %v493 = vmul.f32 %v448, %v485
    %v494 = vmul.f32 %v450, %v486
    %v495 = vmul.f32 %v452, %v487
    %v496 = vmul.f32 %v454, %v488
    %v497 = vmul.f32 %v456, %v489
    %v498 = vmul.f32 %v458, %v490
    %v499 = vpack.c.bf16 %v492, %v491
    %v500 = vpack.c.bf16 %v494, %v493
    %v501 = vpack.c.bf16 %v496, %v495
    %v502 = vpack.c.bf16 %v498, %v497
    %v503 = vpack.c.bf16 %v290, %v289
    %v504 = vpack.c.bf16 %v292, %v291
    %v505 = vpack.c.bf16 %v294, %v293
    %v506 = vpack.c.bf16 %v296, %v295
    %v508 = vsel %vm410, %v499, 0
    %v511 = vsel %vm410, %v500, 0
    %v514 = vsel %vm410, %v501, 0
    %v517 = vsel %vm410, %v502, 0
    %519 = vmatprep.subr.bf16.mxu0 0
    %520 = vmatpush1.bf16.msra.mxu0 %v503
    %521 = vmatprep.subr.bf16.mxu0 0
    %522 = vmatpush1.bf16.msra.mxu0 %v504
    %523 = vmatprep.subr.bf16.mxu0 0
    %524 = vmatpush1.bf16.msra.mxu0 %v505
    %525 = vmatprep.subr.bf16.mxu0 0
    %526 = vmatpush1.bf16.msra.mxu0 %v506
    %527 = vmatprep.subr.bf16.mxu0 0
    %528 = vmatpush1.bf16.msra.mxu0 0
    %529 = vmatprep.subr.bf16.mxu0 0
    %530 = vmatpush1.bf16.msra.mxu0 0
    %531 = vmatprep.subr.bf16.mxu0 0
    %532 = vmatpush1.bf16.msra.mxu0 0
    %533 = vmatprep.subr.bf16.mxu0 0
    %534 = vmatpush1.bf16.msra.mxu0 0
    %535 = vmatprep.subr.bf16.mxu0 0
    %536 = vmatpush1.bf16.msra.mxu0 0
    %537 = vmatprep.subr.bf16.mxu0 0
    %538 = vmatpush1.bf16.msra.mxu0 0
    %539 = vmatprep.subr.bf16.mxu0 0
    %540 = vmatpush1.bf16.msra.mxu0 0
    %541 = vmatprep.subr.bf16.mxu0 0
    %542 = vmatpush1.bf16.msra.mxu0 0
    %543 = vmatprep.subr.bf16.mxu0 0
    %544 = vmatpush1.bf16.msra.mxu0 0
    %545 = vmatprep.subr.bf16.mxu0 0
    %546 = vmatpush1.bf16.msra.mxu0 0
    %547 = vmatprep.subr.bf16.mxu0 0
    %548 = vmatpush1.bf16.msra.mxu0 0
    %549 = vmatprep.subr.bf16.mxu0 0
    %550 = vmatpush1.bf16.msra.mxu0 0
    %551 = vmatprep.mubr.bf16.mxu0 0
    %552 = vmatmul.mubr.bf16.gmra.mrb[0].mxu0 %v508
    %v553 = vpop.f32.mrb[0].mxu0
    %v554 = vadd.f32 0.0, %v553
    %v555 = vpop.f32.mrb[0].mxu0
    %v556 = vpop.f32.mrb[0].mxu0
    %v557 = vadd.f32 0.0, %v556
    %v558 = vpop.f32.mrb[0].mxu0
    %559 = vmatprep.mubr.bf16.mxu0 0
    %560 = vmatmul.mubr.bf16.gmra.mrb[0].mxu0 %v511
    %v561 = vpop.f32.mrb[0].mxu0
    %v562 = vadd.f32 0.0, %v561
    %v563 = vpop.f32.mrb[0].mxu0
    %v564 = vpop.f32.mrb[0].mxu0
    %v565 = vadd.f32 0.0, %v564
    %v566 = vpop.f32.mrb[0].mxu0
    %567 = vmatprep.mubr.bf16.mxu0 0
    %568 = vmatmul.mubr.bf16.gmra.mrb[0].mxu0 %v514
    %v569 = vpop.f32.mrb[0].mxu0
    %v570 = vadd.f32 0.0, %v569
    %v571 = vpop.f32.mrb[0].mxu0
    %v572 = vpop.f32.mrb[0].mxu0
    %v573 = vadd.f32 0.0, %v572
    %v574 = vpop.f32.mrb[0].mxu0
    %575 = vmatprep.mubr.bf16.mxu0 0
    %576 = vmatmul.mubr.bf16.gmra.mrb[0].mxu0 %v517
    %v577 = vpop.f32.mrb[0].mxu0
    %v578 = vadd.f32 0.0, %v577
    %v579 = vpop.f32.mrb[0].mxu0
    %v580 = vpop.f32.mrb[0].mxu0
    %v581 = vadd.f32 0.0, %v580
    %v582 = vpop.f32.mrb[0].mxu0
    %583 = vdwg.mxu0
    %v584 = vsel %vm110, %v554, 0.0
    %v585 = vsel %vm110, %v562, 0.0
    %v586 = vadd.f32 %v584, %v585
    %v587 = vsel %vm110, %v570, 0.0
    %v588 = vadd.f32 %v586, %v587
    %v589 = vsel %vm110, %v578, 0.0
    %v590 = vadd.f32 %v588, %v589
    %v591 = vsel %vm110, %v557, 0.0
    %v592 = vsel %vm110, %v565, 0.0
    %v593 = vadd.f32 %v591, %v592
    %v594 = vsel %vm110, %v573, 0.0
    %v595 = vadd.f32 %v593, %v594
    %v596 = vsel %vm110, %v581, 0.0
    %v597 = vadd.f32 %v595, %v596
    %v598 = vpack.c.bf16 %v597, %v590
    %v603 = vunpack.c.l.b16 %v100
    %v604 = vunpack.c.l.b16 %v101
    %v605 = vunpack.c.l.b16 %v102
    %v606 = vunpack.c.l.b16 %v103
    %v607 = vpack.c.b16 %v604, %v603
    %v608 = vpack.c.b16 %v606, %v605
    %v612 = vsel %vm110, %v598, 0
    %614 = vmatprep.subr.bf16.mxu0 0
    %615 = vmatpush1.bf16.msra.mxu0 %v607
    %616 = vmatprep.subr.bf16.mxu0 0
    %617 = vmatpush1.bf16.msra.mxu0 %v608
    %618 = vmatprep.subr.bf16.mxu0 0
    %619 = vmatpush1.bf16.msra.mxu0 0
    %620 = vmatprep.subr.bf16.mxu0 0
    %621 = vmatpush1.bf16.msra.mxu0 0
    %622 = vmatprep.subr.bf16.mxu0 0
    %623 = vmatpush1.bf16.msra.mxu0 0
    %624 = vmatprep.subr.bf16.mxu0 0
    %625 = vmatpush1.bf16.msra.mxu0 0
    %626 = vmatprep.subr.bf16.mxu0 0
    %627 = vmatpush1.bf16.msra.mxu0 0
    %628 = vmatprep.subr.bf16.mxu0 0
    %629 = vmatpush1.bf16.msra.mxu0 0
    %630 = vmatprep.subr.bf16.mxu0 0
    %631 = vmatpush1.bf16.msra.mxu0 0
    %632 = vmatprep.subr.bf16.mxu0 0
    %633 = vmatpush1.bf16.msra.mxu0 0
    %634 = vmatprep.subr.bf16.mxu0 0
    %635 = vmatpush1.bf16.msra.mxu0 0
    %636 = vmatprep.subr.bf16.mxu0 0
    %637 = vmatpush1.bf16.msra.mxu0 0
    %638 = vmatprep.subr.bf16.mxu0 0
    %639 = vmatpush1.bf16.msra.mxu0 0
    %640 = vmatprep.subr.bf16.mxu0 0
    %641 = vmatpush1.bf16.msra.mxu0 0
    %642 = vmatprep.subr.bf16.mxu0 0
    %643 = vmatpush1.bf16.msra.mxu0 0
    %644 = vmatprep.subr.bf16.mxu0 0
    %645 = vmatpush1.bf16.msra.mxu0 0
    %646 = vmatprep.mubr.bf16.mxu0 0
    %647 = vmatmul.mubr.bf16.gmra.mrb[0].mxu0 %v612
    %v648 = vpop.f32.mrb[0].mxu0
    %v649 = vadd.f32 0.0, %v648
    %v650 = vpop.f32.mrb[0].mxu0
    %v651 = vpop.f32.mrb[0].mxu0
    %v652 = vadd.f32 0.0, %v651
    %v653 = vpop.f32.mrb[0].mxu0
    %654 = vdwg.mxu0
    %v655 = vadd.f32 %v50, %v649
    %v656 = vadd.f32 %v51, %v652
    %v657 = vmul.f32 %v655, %v655
    %v658 = vmul.f32 %v656, %v656
    %v659 = vsel %vm110, %v657, 0.0
    %660 = vadd.xlane.f32.xlu0 %v659
    %v661 = vpop.xlane.xlu0 %660
    %v662 = vsel %vm110, %v658, 0.0
    %663 = vadd.xlane.f32.xlu0 %v662
    %v664 = vpop.xlane.xlu0 %663
    %v665 = vmul.f32 %v661, %v117
    %v666 = vmul.f32 %v664, %v117
    %v667 = vadd.f32 %v665, 1e-06
    %v668 = vadd.f32 %v666, 1e-06
    %v669 = vrsqrt.pop %v667
    %v670 = vrsqrt.pop %v668
    %v671 = vmul.f32 %v655, %v669
    %v672 = vmul.f32 %v656, %v670
    %v673 = vlaneseq
    %v674 = vshrl.u32 %v673, 7
    %v675 = vsub.s32 0, %v674
    %v676 = vrot.slane %v91, %v675
    %v677 = vmul.f32 %v671, %v676
    %v678 = vmul.f32 %v672, %v676
    %v679 = vpack.c.bf16 %v678, %v677
    %v684 = vunpack.c.l.b16 %v96
    %v685 = vunpack.c.l.b16 %v97
    %v686 = vunpack.c.l.b16 %v98
    %v687 = vunpack.c.l.b16 %v99
    %v688 = vpack.c.b16 %v685, %v684
    %v689 = vpack.c.b16 %v687, %v686
    %v693 = vsel %vm110, %v679, 0
    %695 = vmatprep.subr.bf16.mxu0 0
    %696 = vmatpush1.bf16.msra.mxu0 %v688
    %697 = vmatprep.subr.bf16.mxu0 0
    %698 = vmatpush1.bf16.msra.mxu0 %v689
    %699 = vmatprep.subr.bf16.mxu0 0
    %700 = vmatpush1.bf16.msra.mxu0 0
    %701 = vmatprep.subr.bf16.mxu0 0
    %702 = vmatpush1.bf16.msra.mxu0 0
    %703 = vmatprep.subr.bf16.mxu0 0
    %704 = vmatpush1.bf16.msra.mxu0 0
    %705 = vmatprep.subr.bf16.mxu0 0
    %706 = vmatpush1.bf16.msra.mxu0 0
    %707 = vmatprep.subr.bf16.mxu0 0
    %708 = vmatpush1.bf16.msra.mxu0 0
    %709 = vmatprep.subr.bf16.mxu0 0
    %710 = vmatpush1.bf16.msra.mxu0 0
    %711 = vmatprep.subr.bf16.mxu0 0
    %712 = vmatpush1.bf16.msra.mxu0 0
    %713 = vmatprep.subr.bf16.mxu0 0
    %714 = vmatpush1.bf16.msra.mxu0 0
    %715 = vmatprep.subr.bf16.mxu0 0
    %716 = vmatpush1.bf16.msra.mxu0 0
    %717 = vmatprep.subr.bf16.mxu0 0
    %718 = vmatpush1.bf16.msra.mxu0 0
    %719 = vmatprep.subr.bf16.mxu0 0
    %720 = vmatpush1.bf16.msra.mxu0 0
    %721 = vmatprep.subr.bf16.mxu0 0
    %722 = vmatpush1.bf16.msra.mxu0 0
    %723 = vmatprep.subr.bf16.mxu0 0
    %724 = vmatpush1.bf16.msra.mxu0 0
    %725 = vmatprep.subr.bf16.mxu0 0
    %726 = vmatpush1.bf16.msra.mxu0 0
    %727 = vmatprep.mubr.bf16.mxu0 0
    %728 = vmatmul.mubr.bf16.gmra.mrb[0].mxu0 %v693
    %v729 = vpop.f32.mrb[0].mxu0
    %v730 = vadd.f32 0.0, %v729
    %v731 = vpop.f32.mrb[0].mxu0
    %v732 = vpop.f32.mrb[0].mxu0
    %v733 = vadd.f32 0.0, %v732
    %v734 = vpop.f32.mrb[0].mxu0
    %735 = vdwg.mxu0
    %v736 = vmul.f32 %v730, 0.5
    %v737 = vmul.f32 %v733, 0.5
    %v738 = vtanh.pop %v736
    %v739 = vtanh.pop %v737
    %v740 = vadd.f32 %v738, 1.0
    %v741 = vadd.f32 %v739, 1.0
    %v742 = vmul.f32 %v740, 0.5
    %v743 = vmul.f32 %v741, 0.5
    %v744 = vmul.f32 %v730, %v742
    %v745 = vmul.f32 %v733, %v743
    %748 = vrot.lane.b32.xlu0 %v730, 64
    %v749 = vpop.permute.xlu0 %748
    %750 = vrot.lane.b32.xlu0 %v733, 64
    %v751 = vpop.permute.xlu0 %750
    %v754 = vmul.f32 %v744, %v749
    %v755 = vmul.f32 %v745, %v751
    %v756 = vpack.c.bf16 %v755, %v754
    %v761 = vunpack.c.l.b16 %v104
    %v762 = vunpack.c.l.b16 %v105
    %v763 = vunpack.c.l.b16 %v106
    %v764 = vunpack.c.l.b16 %v107
    %v765 = vpack.c.b16 %v762, %v761
    %v766 = vpack.c.b16 %v764, %v763
    %767 = vrot.lane.b32.xlu0 %v607, 96
    %v768 = vpop.permute.xlu0 %767
    %769 = vrot.lane.b32.xlu0 %v608, 96
    %v770 = vpop.permute.xlu0 %769
    %771 = vrot.lane.b32.xlu0 %v765, 96
    %v772 = vpop.permute.xlu0 %771
    %773 = vrot.lane.b32.xlu0 %v766, 96
    %v774 = vpop.permute.xlu0 %773
    %v780 = vsel %vm410, %v756, 0
    %782 = vmatprep.subr.bf16.mxu0 0
    %783 = vmatpush1.bf16.msra.mxu0 %v768
    %784 = vmatprep.subr.bf16.mxu0 0
    %785 = vmatpush1.bf16.msra.mxu0 %v770
    %786 = vmatprep.subr.bf16.mxu0 0
    %787 = vmatpush1.bf16.msra.mxu0 %v772
    %788 = vmatprep.subr.bf16.mxu0 0
    %789 = vmatpush1.bf16.msra.mxu0 %v774
    %790 = vmatprep.subr.bf16.mxu0 0
    %791 = vmatpush1.bf16.msra.mxu0 0
    %792 = vmatprep.subr.bf16.mxu0 0
    %793 = vmatpush1.bf16.msra.mxu0 0
    %794 = vmatprep.subr.bf16.mxu0 0
    %795 = vmatpush1.bf16.msra.mxu0 0
    %796 = vmatprep.subr.bf16.mxu0 0
    %797 = vmatpush1.bf16.msra.mxu0 0
    %798 = vmatprep.subr.bf16.mxu0 0
    %799 = vmatpush1.bf16.msra.mxu0 0
    %800 = vmatprep.subr.bf16.mxu0 0
    %801 = vmatpush1.bf16.msra.mxu0 0
    %802 = vmatprep.subr.bf16.mxu0 0
    %803 = vmatpush1.bf16.msra.mxu0 0
    %804 = vmatprep.subr.bf16.mxu0 0
    %805 = vmatpush1.bf16.msra.mxu0 0
    %806 = vmatprep.subr.bf16.mxu0 0
    %807 = vmatpush1.bf16.msra.mxu0 0
    %808 = vmatprep.subr.bf16.mxu0 0
    %809 = vmatpush1.bf16.msra.mxu0 0
    %810 = vmatprep.subr.bf16.mxu0 0
    %811 = vmatpush1.bf16.msra.mxu0 0
    %812 = vmatprep.subr.bf16.mxu0 0
    %813 = vmatpush1.bf16.msra.mxu0 0
    %814 = vmatprep.mubr.bf16.mxu0 0
    %815 = vmatmul.mubr.bf16.gmra.mrb[0].mxu0 %v780
    %v816 = vpop.f32.mrb[0].mxu0
    %v817 = vadd.f32 0.0, %v816
    %v818 = vpop.f32.mrb[0].mxu0
    %v819 = vpop.f32.mrb[0].mxu0
    %v820 = vadd.f32 0.0, %v819
    %v821 = vpop.f32.mrb[0].mxu0
    %822 = vdwg.mxu0
    %v823 = vadd.f32 %v655, %v817
    %v824 = vadd.f32 %v656, %v820
    %v825 = vld [vmem:[%s1 + $0x26] sm:$0x1]
    %v826 = vld [vmem:[%s1 + $0x27] sm:$0x1]
    %s827 = scalar_lea.vmem [#allocation2], 128
    %v828 = vld [vmem:[%s827] sm:$0xff]
    %v829 = vld [vmem:[%s827 + $0x10] sm:$0xff]
    %v830 = vld [vmem:[%s827 + $0x20] sm:$0xff]
    %v831 = vld [vmem:[%s827 + $0x30] sm:$0xff]
    %v832 = vld [vmem:[%s827 + $0x8] sm:$0xf]
    %v833 = vld [vmem:[%s827 + $0x18] sm:$0xf]
    %v834 = vld [vmem:[%s827 + $0x28] sm:$0xf]
    %v835 = vld [vmem:[%s827 + $0x38] sm:$0xf]
    %v836 = vld [vmem:[%s827 + $0xc] sm:$0xf]
    %v837 = vld [vmem:[%s827 + $0x1c] sm:$0xf]
    %v838 = vld [vmem:[%s827 + $0x2c] sm:$0xf]
    %v839 = vld [vmem:[%s827 + $0x3c] sm:$0xf]
    %v840 = vld [vmem:[%s827 + $0x4c] sm:$0xf]
    %v841 = vld [vmem:[%s827 + $0x5c] sm:$0xf]
    %v842 = vld [vmem:[%s827 + $0x6c] sm:$0xf]
    %v843 = vld [vmem:[%s827 + $0x7c] sm:$0xf]
    %v844 = vmul.f32 %v823, %v823
    %v845 = vmul.f32 %v824, %v824
    %v846 = vsel %vm110, %v844, 0.0
    %847 = vadd.xlane.f32.xlu0 %v846
    %v848 = vpop.xlane.xlu0 %847
    %v849 = vsel %vm110, %v845, 0.0
    %850 = vadd.xlane.f32.xlu0 %v849
    %v851 = vpop.xlane.xlu0 %850
    %v852 = vmul.f32 %v848, %v117
    %v853 = vmul.f32 %v851, %v117
    %v854 = vadd.f32 %v852, 1e-06
    %v855 = vadd.f32 %v853, 1e-06
    %v856 = vrsqrt.pop %v854
    %v857 = vrsqrt.pop %v855
    %v858 = vmul.f32 %v823, %v856
    %v859 = vmul.f32 %v824, %v857
    %v860 = vlaneseq
    %v861 = vshrl.u32 %v860, 7
    %v862 = vsub.s32 0, %v861
    %v863 = vrot.slane %v825, %v862
    %v864 = vmul.f32 %v858, %v863
    %v865 = vmul.f32 %v859, %v863
    %v866 = vpack.c.bf16 %v865, %v864
    %v871 = vunpack.c.l.b16 %v828
    %v872 = vunpack.c.h.b16 %v828
    %v873 = vunpack.c.l.b16 %v829
    %v874 = vunpack.c.h.b16 %v829
    %v875 = vunpack.c.l.b16 %v830
    %v876 = vunpack.c.h.b16 %v830
    %v877 = vunpack.c.l.b16 %v831
    %v878 = vunpack.c.h.b16 %v831
    %v879 = vpack.c.b16 %v873, %v871
    %v880 = vpack.c.b16 %v874, %v872
    %v881 = vpack.c.b16 %v877, %v875
    %v882 = vpack.c.b16 %v878, %v876
    %v888 = vsel %vm110, %v866, 0
    %890 = vmatprep.subr.bf16.mxu0 %v880
    %891 = vmatpush1.bf16.msra.mxu0 %v879
    %892 = vmatprep.subr.bf16.mxu0 %v882
    %893 = vmatpush1.bf16.msra.mxu0 %v881
    %894 = vmatprep.subr.bf16.mxu0 0
    %895 = vmatpush1.bf16.msra.mxu0 0
    %896 = vmatprep.subr.bf16.mxu0 0
    %897 = vmatpush1.bf16.msra.mxu0 0
    %898 = vmatprep.subr.bf16.mxu0 0
    %899 = vmatpush1.bf16.msra.mxu0 0
    %900 = vmatprep.subr.bf16.mxu0 0
    %901 = vmatpush1.bf16.msra.mxu0 0
    %902 = vmatprep.subr.bf16.mxu0 0
    %903 = vmatpush1.bf16.msra.mxu0 0
    %904 = vmatprep.subr.bf16.mxu0 0
    %905 = vmatpush1.bf16.msra.mxu0 0
    %906 = vmatprep.subr.bf16.mxu0 0
    %907 = vmatpush1.bf16.msra.mxu0 0
    %908 = vmatprep.subr.bf16.mxu0 0
    %909 = vmatpush1.bf16.msra.mxu0 0
    %910 = vmatprep.subr.bf16.mxu0 0
    %911 = vmatpush1.bf16.msra.mxu0 0
    %912 = vmatprep.subr.bf16.mxu0 0
    %913 = vmatpush1.bf16.msra.mxu0 0
    %914 = vmatprep.subr.bf16.mxu0 0
    %915 = vmatpush1.bf16.msra.mxu0 0
    %916 = vmatprep.subr.bf16.mxu0 0
    %917 = vmatpush1.bf16.msra.mxu0 0
    %918 = vmatprep.subr.bf16.mxu0 0
    %919 = vmatpush1.bf16.msra.mxu0 0
    %920 = vmatprep.subr.bf16.mxu0 0
    %921 = vmatpush1.bf16.msra.mxu0 0
    %922 = vmatprep.mubr.bf16.mxu0 0
    %923 = vmatmul.mubr.bf16.gmra.mrb[0].mxu0 %v888
    %v924 = vpop.f32.mrb[0].mxu0
    %v925 = vadd.f32 0.0, %v924
    %v926 = vpop.f32.mrb[0].mxu0
    %v927 = vadd.f32 0.0, %v926
    %v928 = vpop.f32.mrb[0].mxu0
    %v929 = vadd.f32 0.0, %v928
    %v930 = vpop.f32.mrb[0].mxu0
    %v931 = vadd.f32 0.0, %v930
    %932 = vdwg.mxu0
    %v933 = vmul.f32 %v925, %v52
    %v934 = vmul.f32 %v929, %v53
    %v935 = vmul.f32 %v925, %v204
    %v936 = vmul.f32 %v929, %v206
    %939 = vrot.lane.b32.xlu0 %v935, 96
    %v940 = vpop.permute.xlu0 %939
    %941 = vrot.lane.b32.xlu0 %v936, 96
    %v942 = vpop.permute.xlu0 %941
    %v945 = vadd.f32 %v933, %v940
    %v946 = vadd.f32 %v934, %v942
    %v947 = vmul.f32 %v925, %v224
    %v948 = vmul.f32 %v929, %v226
    %v949 = vmul.f32 %v925, %v232
    %v950 = vmul.f32 %v929, %v234
    %953 = vrot.lane.b32.xlu0 %v949, 96
    %v954 = vpop.permute.xlu0 %953
    %955 = vrot.lane.b32.xlu0 %v950, 96
    %v956 = vpop.permute.xlu0 %955
    %v959 = vadd.f32 %v947, %v954
    %v960 = vadd.f32 %v948, %v956
    %v961 = vmul.f32 %v959, %v270
    %v962 = vmul.f32 %v960, %v270
    %v963 = vmul.f32 %v959, %v272
    %v964 = vmul.f32 %v960, %v272
    %v965 = vmul.f32 %v959, %v274
    %v966 = vmul.f32 %v960, %v274
    %v967 = vmul.f32 %v959, %v276
    %v968 = vmul.f32 %v960, %v276
    %v969 = vmul.f32 %v927, %v252
    %v970 = vmul.f32 %v931, %v252
    %v971 = vmul.f32 %v927, %v256
    %v972 = vmul.f32 %v931, %v256
    %v973 = vmul.f32 %v927, %v260
    %v974 = vmul.f32 %v931, %v260
    %v975 = vmul.f32 %v927, %v264
    %v976 = vmul.f32 %v931, %v264
    %v977 = vpack.c.bf16 %v946, %v945
    %v978 = vpack.c.bf16 %v962, %v961
    %v979 = vpack.c.bf16 %v964, %v963
    %v980 = vpack.c.bf16 %v966, %v965
    %v981 = vpack.c.bf16 %v968, %v967
    %986 = vrot.lane.b32.xlu0 %v978, 64
    %v987 = vpop.permute.xlu0 %986
    %988 = vrot.lane.b32.xlu0 %v979, 64
    %v989 = vpop.permute.xlu0 %988
    %990 = vrot.lane.b32.xlu0 %v980, 64
    %v991 = vpop.permute.xlu0 %990
    %992 = vrot.lane.b32.xlu0 %v981, 64
    %v993 = vpop.permute.xlu0 %992
    %v995 = vsel %vm110, %v977, 0
    %v998 = vsel %vm110, %v987, 0
    %v1001 = vsel %vm110, %v989, 0
    %v1004 = vsel %vm110, %v991, 0
    %v1007 = vsel %vm110, %v993, 0
    %1009 = vmatprep.subr.bf16.mxu0 0
    %1010 = vmatpush1.bf16.xpose.msra.mxu0 %v998
    %1011 = vmatprep.subr.bf16.mxu0 0
    %1012 = vmatpush1.bf16.xpose.msra.mxu0 %v1001
    %1013 = vmatprep.subr.bf16.mxu0 0
    %1014 = vmatpush1.bf16.xpose.msra.mxu0 %v1004
    %1015 = vmatprep.subr.bf16.mxu0 0
    %1016 = vmatpush1.bf16.xpose.msra.mxu0 %v1007
    %1017 = vmatprep.subr.bf16.mxu0 0
    %1018 = vmatpush1.bf16.xpose.msra.mxu0 0
    %1019 = vmatprep.subr.bf16.mxu0 0
    %1020 = vmatpush1.bf16.xpose.msra.mxu0 0
    %1021 = vmatprep.subr.bf16.mxu0 0
    %1022 = vmatpush1.bf16.xpose.msra.mxu0 0
    %1023 = vmatprep.subr.bf16.mxu0 0
    %1024 = vmatpush1.bf16.xpose.msra.mxu0 0
    %1025 = vmatprep.subr.bf16.mxu0 0
    %1026 = vmatpush1.bf16.xpose.msra.mxu0 0
    %1027 = vmatprep.subr.bf16.mxu0 0
    %1028 = vmatpush1.bf16.xpose.msra.mxu0 0
    %1029 = vmatprep.subr.bf16.mxu0 0
    %1030 = vmatpush1.bf16.xpose.msra.mxu0 0
    %1031 = vmatprep.subr.bf16.mxu0 0
    %1032 = vmatpush1.bf16.xpose.msra.mxu0 0
    %1033 = vmatprep.subr.bf16.mxu0 0
    %1034 = vmatpush1.bf16.xpose.msra.mxu0 0
    %1035 = vmatprep.subr.bf16.mxu0 0
    %1036 = vmatpush1.bf16.xpose.msra.mxu0 0
    %1037 = vmatprep.subr.bf16.mxu0 0
    %1038 = vmatpush1.bf16.xpose.msra.mxu0 0
    %1039 = vmatprep.subr.bf16.mxu0 0
    %1040 = vmatpush1.bf16.xpose.msra.mxu0 0
    %1041 = vmatprep.mubr.bf16.mxu0 0
    %1042 = vmatmul.mubr.bf16.gmra.mrb[0].mxu0 %v995
    %v1043 = vpop.f32.mrb[0].mxu0
    %v1044 = vadd.f32 0.0, %v1043
    %v1045 = vpop.f32.mrb[0].mxu0
    %v1046 = vpop.f32.mrb[0].mxu0
    %v1047 = vadd.f32 0.0, %v1046
    %v1048 = vpop.f32.mrb[0].mxu0
    %1049 = vmatprep.mubr.bf16.mxu0 0
    %1050 = vmatmul.mubr.bf16.gmra.mrb[0].mxu0 %v995
    %v1051 = vpop.f32.mrb[0].mxu0
    %v1052 = vadd.f32 0.0, %v1051
    %v1053 = vpop.f32.mrb[0].mxu0
    %v1054 = vpop.f32.mrb[0].mxu0
    %v1055 = vadd.f32 0.0, %v1054
    %v1056 = vpop.f32.mrb[0].mxu0
    %1057 = vmatprep.mubr.bf16.mxu0 0
    %1058 = vmatmul.mubr.bf16.gmra.mrb[0].mxu0 %v995
    %v1059 = vpop.f32.mrb[0].mxu0
    %v1060 = vadd.f32 0.0, %v1059
    %v1061 = vpop.f32.mrb[0].mxu0
    %v1062 = vpop.f32.mrb[0].mxu0
    %v1063 = vadd.f32 0.0, %v1062
    %v1064 = vpop.f32.mrb[0].mxu0
    %1065 = vmatprep.mubr.bf16.mxu0 0
    %1066 = vmatmul.mubr.bf16.gmra.mrb[0].mxu0 %v995
    %v1067 = vpop.f32.mrb[0].mxu0
    %v1068 = vadd.f32 0.0, %v1067
    %v1069 = vpop.f32.mrb[0].mxu0
    %v1070 = vpop.f32.mrb[0].mxu0
    %v1071 = vadd.f32 0.0, %v1070
    %v1072 = vpop.f32.mrb[0].mxu0
    %1073 = vdwg.mxu0
    %v1074 = vmul.f32 %v1044, 0.35355338
    %v1075 = vmul.f32 %v1047, 0.35355338
    %v1076 = vmul.f32 %v1052, 0.35355338
    %v1077 = vmul.f32 %v1055, 0.35355338
    %v1078 = vmul.f32 %v1060, 0.35355338
    %v1079 = vmul.f32 %v1063, 0.35355338
    %v1080 = vmul.f32 %v1068, 0.35355338
    %v1081 = vmul.f32 %v1071, 0.35355338
    %v1082 = vadd.f32 %v1074, %v82
    %v1083 = vadd.f32 %v1075, %v83
    %v1084 = vadd.f32 %v1076, %v84
    %v1085 = vadd.f32 %v1077, %v85
    %v1086 = vadd.f32 %v1078, %v86
    %v1087 = vadd.f32 %v1079, %v87
    %v1088 = vadd.f32 %v1080, %v88
    %v1089 = vadd.f32 %v1081, %v89
    %v1090 = vsel %vm410, %v1082, -inf
    %1091 = vmax.xlane.f32.xlu0 %v1090
    %v1092 = vpop.xlane.xlu0 %1091
    %v1093 = vsel %vm410, %v1083, -inf
    %1094 = vmax.xlane.f32.xlu0 %v1093
    %v1095 = vpop.xlane.xlu0 %1094
    %v1096 = vsel %vm410, %v1084, -inf
    %1097 = vmax.xlane.f32.xlu0 %v1096
    %v1098 = vpop.xlane.xlu0 %1097
    %v1099 = vsel %vm410, %v1085, -inf
    %1100 = vmax.xlane.f32.xlu0 %v1099
    %v1101 = vpop.xlane.xlu0 %1100
    %v1102 = vsel %vm410, %v1086, -inf
    %1103 = vmax.xlane.f32.xlu0 %v1102
    %v1104 = vpop.xlane.xlu0 %1103
    %v1105 = vsel %vm410, %v1087, -inf
    %1106 = vmax.xlane.f32.xlu0 %v1105
    %v1107 = vpop.xlane.xlu0 %1106
    %v1108 = vsel %vm410, %v1088, -inf
    %1109 = vmax.xlane.f32.xlu0 %v1108
    %v1110 = vpop.xlane.xlu0 %1109
    %v1111 = vsel %vm410, %v1089, -inf
    %1112 = vmax.xlane.f32.xlu0 %v1111
    %v1113 = vpop.xlane.xlu0 %1112
    %v1114 = vsub.f32 %v1082, %v1092
    %v1115 = vsub.f32 %v1083, %v1095
    %v1116 = vsub.f32 %v1084, %v1098
    %v1117 = vsub.f32 %v1085, %v1101
    %v1118 = vsub.f32 %v1086, %v1104
    %v1119 = vsub.f32 %v1087, %v1107
    %v1120 = vsub.f32 %v1088, %v1110
    %v1121 = vsub.f32 %v1089, %v1113
    %v1122 = vmul.f32 %v1114, 1.442695
    %v1123 = vpow.pop %v1122
    %v1124 = vmul.f32 %v1115, 1.442695
    %v1125 = vpow.pop %v1124
    %v1126 = vmul.f32 %v1116, 1.442695
    %v1127 = vpow.pop %v1126
    %v1128 = vmul.f32 %v1117, 1.442695
    %v1129 = vpow.pop %v1128
    %v1130 = vmul.f32 %v1118, 1.442695
    %v1131 = vpow.pop %v1130
    %v1132 = vmul.f32 %v1119, 1.442695
    %v1133 = vpow.pop %v1132
    %v1134 = vmul.f32 %v1120, 1.442695
    %v1135 = vpow.pop %v1134
    %v1136 = vmul.f32 %v1121, 1.442695
    %v1137 = vpow.pop %v1136
    %v1138 = vsel %vm410, %v1123, 0.0
    %1139 = vadd.xlane.f32.xlu0 %v1138
    %v1140 = vpop.xlane.xlu0 %1139
    %v1141 = vsel %vm410, %v1125, 0.0
    %1142 = vadd.xlane.f32.xlu0 %v1141
    %v1143 = vpop.xlane.xlu0 %1142
    %v1144 = vsel %vm410, %v1127, 0.0
    %1145 = vadd.xlane.f32.xlu0 %v1144
    %v1146 = vpop.xlane.xlu0 %1145
    %v1147 = vsel %vm410, %v1129, 0.0
    %1148 = vadd.xlane.f32.xlu0 %v1147
    %v1149 = vpop.xlane.xlu0 %1148
    %v1150 = vsel %vm410, %v1131, 0.0
    %1151 = vadd.xlane.f32.xlu0 %v1150
    %v1152 = vpop.xlane.xlu0 %1151
    %v1153 = vsel %vm410, %v1133, 0.0
    %1154 = vadd.xlane.f32.xlu0 %v1153
    %v1155 = vpop.xlane.xlu0 %1154
    %v1156 = vsel %vm410, %v1135, 0.0
    %1157 = vadd.xlane.f32.xlu0 %v1156
    %v1158 = vpop.xlane.xlu0 %1157
    %v1159 = vsel %vm410, %v1137, 0.0
    %1160 = vadd.xlane.f32.xlu0 %v1159
    %v1161 = vpop.xlane.xlu0 %1160
    %v1162 = vrcp.pop %v1140
    %v1163 = vrcp.pop %v1143
    %v1164 = vrcp.pop %v1146
    %v1165 = vrcp.pop %v1149
    %v1166 = vrcp.pop %v1152
    %v1167 = vrcp.pop %v1155
    %v1168 = vrcp.pop %v1158
    %v1169 = vrcp.pop %v1161
    %v1170 = vmul.f32 %v1123, %v1162
    %v1171 = vmul.f32 %v1125, %v1163
    %v1172 = vmul.f32 %v1127, %v1164
    %v1173 = vmul.f32 %v1129, %v1165
    %v1174 = vmul.f32 %v1131, %v1166
    %v1175 = vmul.f32 %v1133, %v1167
    %v1176 = vmul.f32 %v1135, %v1168
    %v1177 = vmul.f32 %v1137, %v1169
    %v1178 = vpack.c.bf16 %v1171, %v1170
    %v1179 = vpack.c.bf16 %v1173, %v1172
    %v1180 = vpack.c.bf16 %v1175, %v1174
    %v1181 = vpack.c.bf16 %v1177, %v1176
    %v1182 = vpack.c.bf16 %v970, %v969
    %v1183 = vpack.c.bf16 %v972, %v971
    %v1184 = vpack.c.bf16 %v974, %v973
    %v1185 = vpack.c.bf16 %v976, %v975
    %v1187 = vsel %vm410, %v1178, 0
    %v1190 = vsel %vm410, %v1179, 0
    %v1193 = vsel %vm410, %v1180, 0
    %v1196 = vsel %vm410, %v1181, 0
    %1198 = vmatprep.subr.bf16.mxu0 0
    %1199 = vmatpush1.bf16.msra.mxu0 %v1182
    %1200 = vmatprep.subr.bf16.mxu0 0
    %1201 = vmatpush1.bf16.msra.mxu0 %v1183
    %1202 = vmatprep.subr.bf16.mxu0 0
    %1203 = vmatpush1.bf16.msra.mxu0 %v1184
    %1204 = vmatprep.subr.bf16.mxu0 0
    %1205 = vmatpush1.bf16.msra.mxu0 %v1185
    %1206 = vmatprep.subr.bf16.mxu0 0
    %1207 = vmatpush1.bf16.msra.mxu0 0
    %1208 = vmatprep.subr.bf16.mxu0 0
    %1209 = vmatpush1.bf16.msra.mxu0 0
    %1210 = vmatprep.subr.bf16.mxu0 0
    %1211 = vmatpush1.bf16.msra.mxu0 0
    %1212 = vmatprep.subr.bf16.mxu0 0
    %1213 = vmatpush1.bf16.msra.mxu0 0
    %1214 = vmatprep.subr.bf16.mxu0 0
    %1215 = vmatpush1.bf16.msra.mxu0 0
    %1216 = vmatprep.subr.bf16.mxu0 0
    %1217 = vmatpush1.bf16.msra.mxu0 0
    %1218 = vmatprep.subr.bf16.mxu0 0
    %1219 = vmatpush1.bf16.msra.mxu0 0
    %1220 = vmatprep.subr.bf16.mxu0 0
    %1221 = vmatpush1.bf16.msra.mxu0 0
    %1222 = vmatprep.subr.bf16.mxu0 0
    %1223 = vmatpush1.bf16.msra.mxu0 0
    %1224 = vmatprep.subr.bf16.mxu0 0
    %1225 = vmatpush1.bf16.msra.mxu0 0
    %1226 = vmatprep.subr.bf16.mxu0 0
    %1227 = vmatpush1.bf16.msra.mxu0 0
    %1228 = vmatprep.subr.bf16.mxu0 0
    %1229 = vmatpush1.bf16.msra.mxu0 0
    %1230 = vmatprep.mubr.bf16.mxu0 0
    %1231 = vmatmul.mubr.bf16.gmra.mrb[0].mxu0 %v1187
    %v1232 = vpop.f32.mrb[0].mxu0
    %v1233 = vadd.f32 0.0, %v1232
    %v1234 = vpop.f32.mrb[0].mxu0
    %v1235 = vpop.f32.mrb[0].mxu0
    %v1236 = vadd.f32 0.0, %v1235
    %v1237 = vpop.f32.mrb[0].mxu0
    %1238 = vmatprep.mubr.bf16.mxu0 0
    %1239 = vmatmul.mubr.bf16.gmra.mrb[0].mxu0 %v1190
    %v1240 = vpop.f32.mrb[0].mxu0
    %v1241 = vadd.f32 0.0, %v1240
    %v1242 = vpop.f32.mrb[0].mxu0
    %v1243 = vpop.f32.mrb[0].mxu0
    %v1244 = vadd.f32 0.0, %v1243
    %v1245 = vpop.f32.mrb[0].mxu0
    %1246 = vmatprep.mubr.bf16.mxu0 0
    %1247 = vmatmul.mubr.bf16.gmra.mrb[0].mxu0 %v1193
    %v1248 = vpop.f32.mrb[0].mxu0
    %v1249 = vadd.f32 0.0, %v1248
    %v1250 = vpop.f32.mrb[0].mxu0
    %v1251 = vpop.f32.mrb[0].mxu0
    %v1252 = vadd.f32 0.0, %v1251
    %v1253 = vpop.f32.mrb[0].mxu0
    %1254 = vmatprep.mubr.bf16.mxu0 0
    %1255 = vmatmul.mubr.bf16.gmra.mrb[0].mxu0 %v1196
    %v1256 = vpop.f32.mrb[0].mxu0
    %v1257 = vadd.f32 0.0, %v1256
    %v1258 = vpop.f32.mrb[0].mxu0
    %v1259 = vpop.f32.mrb[0].mxu0
    %v1260 = vadd.f32 0.0, %v1259
    %v1261 = vpop.f32.mrb[0].mxu0
    %1262 = vdwg.mxu0
    %v1263 = vsel %vm110, %v1233, 0.0
    %v1264 = vsel %vm110, %v1241, 0.0
    %v1265 = vadd.f32 %v1263, %v1264
    %v1266 = vsel %vm110, %v1249, 0.0
    %v1267 = vadd.f32 %v1265, %v1266
    %v1268 = vsel %vm110, %v1257, 0.0
    %v1269 = vadd.f32 %v1267, %v1268
    %v1270 = vsel %vm110, %v1236, 0.0
    %v1271 = vsel %vm110, %v1244, 0.0
    %v1272 = vadd.f32 %v1270, %v1271
    %v1273 = vsel %vm110, %v1252, 0.0
    %v1274 = vadd.f32 %v1272, %v1273
    %v1275 = vsel %vm110, %v1260, 0.0
    %v1276 = vadd.f32 %v1274, %v1275
    %v1277 = vpack.c.bf16 %v1276, %v1269
    %v1282 = vunpack.c.l.b16 %v836
    %v1283 = vunpack.c.l.b16 %v837
    %v1284 = vunpack.c.l.b16 %v838
    %v1285 = vunpack.c.l.b16 %v839
    %v1286 = vpack.c.b16 %v1283, %v1282
    %v1287 = vpack.c.b16 %v1285, %v1284
    %v1291 = vsel %vm110, %v1277, 0
    %1293 = vmatprep.subr.bf16.mxu0 0
    %1294 = vmatpush1.bf16.msra.mxu0 %v1286
    %1295 = vmatprep.subr.bf16.mxu0 0
    %1296 = vmatpush1.bf16.msra.mxu0 %v1287
    %1297 = vmatprep.subr.bf16.mxu0 0
    %1298 = vmatpush1.bf16.msra.mxu0 0
    %1299 = vmatprep.subr.bf16.mxu0 0
    %1300 = vmatpush1.bf16.msra.mxu0 0
    %1301 = vmatprep.subr.bf16.mxu0 0
    %1302 = vmatpush1.bf16.msra.mxu0 0
    %1303 = vmatprep.subr.bf16.mxu0 0
    %1304 = vmatpush1.bf16.msra.mxu0 0
    %1305 = vmatprep.subr.bf16.mxu0 0
    %1306 = vmatpush1.bf16.msra.mxu0 0
    %1307 = vmatprep.subr.bf16.mxu0 0
    %1308 = vmatpush1.bf16.msra.mxu0 0
    %1309 = vmatprep.subr.bf16.mxu0 0
    %1310 = vmatpush1.bf16.msra.mxu0 0
    %1311 = vmatprep.subr.bf16.mxu0 0
    %1312 = vmatpush1.bf16.msra.mxu0 0
    %1313 = vmatprep.subr.bf16.mxu0 0
    %1314 = vmatpush1.bf16.msra.mxu0 0
    %1315 = vmatprep.subr.bf16.mxu0 0
    %1316 = vmatpush1.bf16.msra.mxu0 0
    %1317 = vmatprep.subr.bf16.mxu0 0
    %1318 = vmatpush1.bf16.msra.mxu0 0
    %1319 = vmatprep.subr.bf16.mxu0 0
    %1320 = vmatpush1.bf16.msra.mxu0 0
    %1321 = vmatprep.subr.bf16.mxu0 0
    %1322 = vmatpush1.bf16.msra.mxu0 0
    %1323 = vmatprep.subr.bf16.mxu0 0
    %1324 = vmatpush1.bf16.msra.mxu0 0
    %1325 = vmatprep.mubr.bf16.mxu0 0
    %1326 = vmatmul.mubr.bf16.gmra.mrb[0].mxu0 %v1291
    %v1327 = vpop.f32.mrb[0].mxu0
    %v1328 = vadd.f32 0.0, %v1327
    %v1329 = vpop.f32.mrb[0].mxu0
    %v1330 = vpop.f32.mrb[0].mxu0
    %v1331 = vadd.f32 0.0, %v1330
    %v1332 = vpop.f32.mrb[0].mxu0
    %1333 = vdwg.mxu0
    %v1334 = vadd.f32 %v823, %v1328
    %v1335 = vadd.f32 %v824, %v1331
    %v1336 = vmul.f32 %v1334, %v1334
    %v1337 = vmul.f32 %v1335, %v1335
    %v1338 = vsel %vm110, %v1336, 0.0
    %1339 = vadd.xlane.f32.xlu0 %v1338
    %v1340 = vpop.xlane.xlu0 %1339
    %v1341 = vsel %vm110, %v1337, 0.0
    %1342 = vadd.xlane.f32.xlu0 %v1341
    %v1343 = vpop.xlane.xlu0 %1342
    %v1344 = vmul.f32 %v1340, %v117
    %v1345 = vmul.f32 %v1343, %v117
    %v1346 = vadd.f32 %v1344, 1e-06
    %v1347 = vadd.f32 %v1345, 1e-06
    %v1348 = vrsqrt.pop %v1346
    %v1349 = vrsqrt.pop %v1347
    %v1350 = vmul.f32 %v1334, %v1348
    %v1351 = vmul.f32 %v1335, %v1349
    %v1352 = vlaneseq
    %v1353 = vshrl.u32 %v1352, 7
    %v1354 = vsub.s32 0, %v1353
    %v1355 = vrot.slane %v826, %v1354
    %v1356 = vmul.f32 %v1350, %v1355
    %v1357 = vmul.f32 %v1351, %v1355
    %v1358 = vpack.c.bf16 %v1357, %v1356
    %v1363 = vunpack.c.l.b16 %v832
    %v1364 = vunpack.c.l.b16 %v833
    %v1365 = vunpack.c.l.b16 %v834
    %v1366 = vunpack.c.l.b16 %v835
    %v1367 = vpack.c.b16 %v1364, %v1363
    %v1368 = vpack.c.b16 %v1366, %v1365
    %v1372 = vsel %vm110, %v1358, 0
    %1374 = vmatprep.subr.bf16.mxu0 0
    %1375 = vmatpush1.bf16.msra.mxu0 %v1367
    %1376 = vmatprep.subr.bf16.mxu0 0
    %1377 = vmatpush1.bf16.msra.mxu0 %v1368
    %1378 = vmatprep.subr.bf16.mxu0 0
    %1379 = vmatpush1.bf16.msra.mxu0 0
    %1380 = vmatprep.subr.bf16.mxu0 0
    %1381 = vmatpush1.bf16.msra.mxu0 0
    %1382 = vmatprep.subr.bf16.mxu0 0
    %1383 = vmatpush1.bf16.msra.mxu0 0
    %1384 = vmatprep.subr.bf16.mxu0 0
    %1385 = vmatpush1.bf16.msra.mxu0 0
    %1386 = vmatprep.subr.bf16.mxu0 0
    %1387 = vmatpush1.bf16.msra.mxu0 0
    %1388 = vmatprep.subr.bf16.mxu0 0
    %1389 = vmatpush1.bf16.msra.mxu0 0
    %1390 = vmatprep.subr.bf16.mxu0 0
    %1391 = vmatpush1.bf16.msra.mxu0 0
    %1392 = vmatprep.subr.bf16.mxu0 0
    %1393 = vmatpush1.bf16.msra.mxu0 0
    %1394 = vmatprep.subr.bf16.mxu0 0
    %1395 = vmatpush1.bf16.msra.mxu0 0
    %1396 = vmatprep.subr.bf16.mxu0 0
    %1397 = vmatpush1.bf16.msra.mxu0 0
    %1398 = vmatprep.subr.bf16.mxu0 0
    %1399 = vmatpush1.bf16.msra.mxu0 0
    %1400 = vmatprep.subr.bf16.mxu0 0
    %1401 = vmatpush1.bf16.msra.mxu0 0
    %1402 = vmatprep.subr.bf16.mxu0 0
    %1403 = vmatpush1.bf16.msra.mxu0 0
    %1404 = vmatprep.subr.bf16.mxu0 0
    %1405 = vmatpush1.bf16.msra.mxu0 0
    %1406 = vmatprep.mubr.bf16.mxu0 0
    %1407 = vmatmul.mubr.bf16.gmra.mrb[0].mxu0 %v1372
    %v1408 = vpop.f32.mrb[0].mxu0
    %v1409 = vadd.f32 0.0, %v1408
    %v1410 = vpop.f32.mrb[0].mxu0
    %v1411 = vpop.f32.mrb[0].mxu0
    %v1412 = vadd.f32 0.0, %v1411
    %v1413 = vpop.f32.mrb[0].mxu0
    %1414 = vdwg.mxu0
    %v1415 = vmul.f32 %v1409, 0.5
    %v1416 = vmul.f32 %v1412, 0.5
    %v1417 = vtanh.pop %v1415
    %v1418 = vtanh.pop %v1416
    %v1419 = vadd.f32 %v1417, 1.0
    %v1420 = vadd.f32 %v1418, 1.0
    %v1421 = vmul.f32 %v1419, 0.5
    %v1422 = vmul.f32 %v1420, 0.5
    %v1423 = vmul.f32 %v1409, %v1421
    %v1424 = vmul.f32 %v1412, %v1422
    %1427 = vrot.lane.b32.xlu0 %v1409, 64
    %v1428 = vpop.permute.xlu0 %1427
    %1429 = vrot.lane.b32.xlu0 %v1412, 64
    %v1430 = vpop.permute.xlu0 %1429
    %v1433 = vmul.f32 %v1423, %v1428
    %v1434 = vmul.f32 %v1424, %v1430
    %v1435 = vpack.c.bf16 %v1434, %v1433
    %v1440 = vunpack.c.l.b16 %v840
    %v1441 = vunpack.c.l.b16 %v841
    %v1442 = vunpack.c.l.b16 %v842
    %v1443 = vunpack.c.l.b16 %v843
    %v1444 = vpack.c.b16 %v1441, %v1440
    %v1445 = vpack.c.b16 %v1443, %v1442
    %1446 = vrot.lane.b32.xlu0 %v1286, 96
    %v1447 = vpop.permute.xlu0 %1446
    %1448 = vrot.lane.b32.xlu0 %v1287, 96
    %v1449 = vpop.permute.xlu0 %1448
    %1450 = vrot.lane.b32.xlu0 %v1444, 96
    %v1451 = vpop.permute.xlu0 %1450
    %1452 = vrot.lane.b32.xlu0 %v1445, 96
    %v1453 = vpop.permute.xlu0 %1452
    %v1459 = vsel %vm410, %v1435, 0
    %1461 = vmatprep.subr.bf16.mxu0 0
    %1462 = vmatpush1.bf16.msra.mxu0 %v1447
    %1463 = vmatprep.subr.bf16.mxu0 0
    %1464 = vmatpush1.bf16.msra.mxu0 %v1449
    %1465 = vmatprep.subr.bf16.mxu0 0
    %1466 = vmatpush1.bf16.msra.mxu0 %v1451
    %1467 = vmatprep.subr.bf16.mxu0 0
    %1468 = vmatpush1.bf16.msra.mxu0 %v1453
    %1469 = vmatprep.subr.bf16.mxu0 0
    %1470 = vmatpush1.bf16.msra.mxu0 0
    %1471 = vmatprep.subr.bf16.mxu0 0
    %1472 = vmatpush1.bf16.msra.mxu0 0
    %1473 = vmatprep.subr.bf16.mxu0 0
    %1474 = vmatpush1.bf16.msra.mxu0 0
    %1475 = vmatprep.subr.bf16.mxu0 0
    %1476 = vmatpush1.bf16.msra.mxu0 0
    %1477 = vmatprep.subr.bf16.mxu0 0
    %1478 = vmatpush1.bf16.msra.mxu0 0
    %1479 = vmatprep.subr.bf16.mxu0 0
    %1480 = vmatpush1.bf16.msra.mxu0 0
    %1481 = vmatprep.subr.bf16.mxu0 0
    %1482 = vmatpush1.bf16.msra.mxu0 0
    %1483 = vmatprep.subr.bf16.mxu0 0
    %1484 = vmatpush1.bf16.msra.mxu0 0
    %1485 = vmatprep.subr.bf16.mxu0 0
    %1486 = vmatpush1.bf16.msra.mxu0 0
    %1487 = vmatprep.subr.bf16.mxu0 0
    %1488 = vmatpush1.bf16.msra.mxu0 0
    %1489 = vmatprep.subr.bf16.mxu0 0
    %1490 = vmatpush1.bf16.msra.mxu0 0
    %1491 = vmatprep.subr.bf16.mxu0 0
    %1492 = vmatpush1.bf16.msra.mxu0 0
    %1493 = vmatprep.mubr.bf16.mxu0 0
    %1494 = vmatmul.mubr.bf16.gmra.mrb[0].mxu0 %v1459
    %v1495 = vpop.f32.mrb[0].mxu0
    %v1496 = vadd.f32 0.0, %v1495
    %v1497 = vpop.f32.mrb[0].mxu0
    %v1498 = vpop.f32.mrb[0].mxu0
    %v1499 = vadd.f32 0.0, %v1498
    %v1500 = vpop.f32.mrb[0].mxu0
    %1501 = vdwg.mxu0
    %v1502 = vadd.f32 %v1334, %v1496
    %v1503 = vadd.f32 %v1335, %v1499
    %v1504 = vld [vmem:[%s1 + $0x28] sm:$0x1]
    %v1505 = vmul.f32 %v1502, %v1502
    %v1506 = vmul.f32 %v1503, %v1503
    %v1507 = vsel %vm110, %v1505, 0.0
    %1508 = vadd.xlane.f32.xlu0 %v1507
    %v1509 = vpop.xlane.xlu0 %1508
    %v1510 = vsel %vm110, %v1506, 0.0
    %1511 = vadd.xlane.f32.xlu0 %v1510
    %v1512 = vpop.xlane.xlu0 %1511
    %v1513 = vmul.f32 %v1509, %v117
    %v1514 = vmul.f32 %v1512, %v117
    %v1515 = vadd.f32 %v1513, 1e-06
    %v1516 = vadd.f32 %v1514, 1e-06
    %v1517 = vrsqrt.pop %v1515
    %v1518 = vrsqrt.pop %v1516
    %v1519 = vmul.f32 %v1502, %v1517
    %v1520 = vmul.f32 %v1503, %v1518
    %v1521 = vlaneseq
    %v1522 = vshrl.u32 %v1521, 7
    %v1523 = vsub.s32 0, %v1522
    %v1524 = vrot.slane %v1504, %v1523
    %v1525 = vmul.f32 %v1519, %v1524
    %v1526 = vmul.f32 %v1520, %v1524
    %v1527 = vpack.c.bf16 %v1526, %v1525
    %v1528 = vld [vmem:[#allocation5] sm:$0xf]
    %v1529 = vld [vmem:[#allocation5 + $0x4] sm:$0xf]
    %v1530 = vld [vmem:[#allocation5 + $0x8] sm:$0xf]
    %v1531 = vld [vmem:[#allocation5 + $0xc] sm:$0xf]
    %v1536 = vunpack.c.l.b16 %v1528
    %v1537 = vunpack.c.l.b16 %v1529
    %v1538 = vunpack.c.l.b16 %v1530
    %v1539 = vunpack.c.l.b16 %v1531
    %v1540 = vpack.c.b16 %v1537, %v1536
    %v1541 = vpack.c.b16 %v1539, %v1538
    %v1545 = vsel %vm110, %v1527, 0
    %1547 = vmatprep.subr.bf16.mxu0 0
    %1548 = vmatpush1.bf16.msra.mxu0 %v1540
    %1549 = vmatprep.subr.bf16.mxu0 0
    %1550 = vmatpush1.bf16.msra.mxu0 %v1541
    %1551 = vmatprep.subr.bf16.mxu0 0
    %1552 = vmatpush1.bf16.msra.mxu0 0
    %1553 = vmatprep.subr.bf16.mxu0 0
    %1554 = vmatpush1.bf16.msra.mxu0 0
    %1555 = vmatprep.subr.bf16.mxu0 0
    %1556 = vmatpush1.bf16.msra.mxu0 0
    %1557 = vmatprep.subr.bf16.mxu0 0
    %1558 = vmatpush1.bf16.msra.mxu0 0
    %1559 = vmatprep.subr.bf16.mxu0 0
    %1560 = vmatpush1.bf16.msra.mxu0 0
    %1561 = vmatprep.subr.bf16.mxu0 0
    %1562 = vmatpush1.bf16.msra.mxu0 0
    %1563 = vmatprep.subr.bf16.mxu0 0
    %1564 = vmatpush1.bf16.msra.mxu0 0
    %1565 = vmatprep.subr.bf16.mxu0 0
    %1566 = vmatpush1.bf16.msra.mxu0 0
    %1567 = vmatprep.subr.bf16.mxu0 0
    %1568 = vmatpush1.bf16.msra.mxu0 0
    %1569 = vmatprep.subr.bf16.mxu0 0
    %1570 = vmatpush1.bf16.msra.mxu0 0
    %1571 = vmatprep.subr.bf16.mxu0 0
    %1572 = vmatpush1.bf16.msra.mxu0 0
    %1573 = vmatprep.subr.bf16.mxu0 0
    %1574 = vmatpush1.bf16.msra.mxu0 0
    %1575 = vmatprep.subr.bf16.mxu0 0
    %1576 = vmatpush1.bf16.msra.mxu0 0
    %1577 = vmatprep.subr.bf16.mxu0 0
    %1578 = vmatpush1.bf16.msra.mxu0 0
    %1579 = vmatprep.mubr.bf16.mxu0 0
    %1580 = vmatmul.mubr.bf16.gmra.mrb[0].mxu0 %v1545
    %v1581 = vpop.f32.mrb[0].mxu0
    %v1582 = vadd.f32 0.0, %v1581
    %v1583 = vpop.f32.mrb[0].mxu0
    %v1584 = vpop.f32.mrb[0].mxu0
    %v1585 = vadd.f32 0.0, %v1584
    %v1586 = vpop.f32.mrb[0].mxu0
    %1587 = vdwg.mxu0
    %1588 = vst [vmem:[#allocation7] sm:$0xff] %v1582
    %1589 = vst [vmem:[#allocation7 + $0x8] sm:$0xff] %v1585
    // Predicated region
    $region30: #{llama2_top_mocker_forward.1} parent=1 // pred_check
      _
    $region31: #{llama2_top_mocker_forward.1} parent=1 // pred_check_branch
      %1591 = sbr.rel (0) target = $region33
    $region32: #{llama2_top_mocker_forward.1} parent=1 // pred_region
      %s1593 = ssub.s32 256, 256
      %1594 = vsyncadd [#allocation4], %s1593
      %s1595 = sshll.u32 [#allocation7], 4
      %s1596 = int_to_ptr.vmem [resolvable:$true] %s1595
      %1601 = dma.vmem_to_hbm [thread:$0]  %s1596, 256, %s5, [#allocation4], 128, 128, 8
    $region33: #{llama2_top_mocker_forward.1} parent=1 // pred_fallthru
      _
    // Predicated region
    $region34: #{llama2_top_mocker_forward.1} parent=1 // pred_check
      _
    $region35: #{llama2_top_mocker_forward.1} parent=1 // pred_check_branch
      %1603 = sbr.rel (0) target = $region37
    $region36: #{llama2_top_mocker_forward.1} parent=1 // pred_region
      %1604 = dma.done [#allocation4], 256
    $region37: #{llama2_top_mocker_forward.1} parent=1 // pred_fallthru
      _
    %1605 = vsyncpa [#allocation3], 1
    %1606 = vsyncpa [#allocation6], 1
    %1607 = vsyncpa [#allocation4], 1

</llo_original>
